<compile_context>
chip_gen: v7x
topology: tpu7x:2x2x1
jax: 0.10.0
libtpu: 0.0.40
codegen_flags: <defaults>
</compile_context>

<pallas_src>
import functools

import jax
import jax.numpy as jnp
from jax import lax
from jax.experimental import pallas as pl
from jax.experimental.pallas import tpu as pltpu

INPUT_SIZE = 1
HIDDEN = 32
NUM_LAYERS = 2
OUTPUT_SIZE = 1


def lstm_forward_kernel(x_ref, w1_ref, b1_ref,
                        wih0_ref, whh0_ref,
                        wcat1_ref, w2_ref, b2_ref,
                        out_ref, *, T, B):
    F = x_ref.shape[1]
    H = whh0_ref.shape[0]            # whh0 is (H, 4H)

    # ---- hoisted prologue: linear_1 + ReLU + layer-0 input projection for all T ----
    if F == 1:
        # (T*B,1) * (1,H) broadcast on the VPU -- avoids a 1-deep MXU contraction.
        z = x_ref[...] * w1_ref[...] + b1_ref[...]
    else:
        z = (jnp.dot(x_ref[...], w1_ref[...], preferred_element_type=jnp.float32)
             + b1_ref[...])
    z = jnp.maximum(z, 0.0)                                        # (T*B, H)
    g0_all = jnp.dot(z, wih0_ref[...],
                     preferred_element_type=jnp.float32)           # (T*B, 4H)

    # ---- hoist weight loads out of the recurrence (they fit in the vreg file) ----
    whh0 = whh0_ref[...]             # (H, 4H)   layer-0 recurrent weights (permuted)
    wcat1 = wcat1_ref[...]           # (2H, 4H)  fused [Wih1; Whh1]        (permuted)
    w2 = w2_ref[...]                 # (1, 2H)
    b2 = b2_ref[...]                 # (1, 1)

    def gate_apply(gates, c):
        # gate columns pre-permuted to (i, f, o | g)
        ifo = jax.nn.sigmoid(gates[:, 0:3 * H])
        g = jnp.tanh(gates[:, 3 * H:4 * H])
        i = ifo[:, 0:H]
        f = ifo[:, H:2 * H]
        o = ifo[:, 2 * H:3 * H]
        c_new = f * c + i * g
        h_new = o * jnp.tanh(c_new)
        return h_new, c_new

    zeros = jnp.zeros((B, H), jnp.float32)
    h0, c0, h1, c1 = zeros, zeros, zeros, zeros

    # ---- fully unrolled recurrence (T is small & static) ----
    for t in range(T):
        g0_t = g0_all[t * B:(t + 1) * B, :]                        # static sublane slice
        gates0 = g0_t + jnp.dot(h0, whh0, preferred_element_type=jnp.float32)
        h0, c0 = gate_apply(gates0, c0)

        hcat = jnp.concatenate([h0, h1], axis=-1)                  # (B, 2H)
        gates1 = jnp.dot(hcat, wcat1, preferred_element_type=jnp.float32)
        h1, c1 = gate_apply(gates1, c1)

    # ---- linear_2 epilogue (OUTPUT_SIZE == 1): VPU multiply + lane reduction ----
    out = (jnp.sum(h0 * w2[:, 0:H], axis=-1, keepdims=True)
           + jnp.sum(h1 * w2[:, H:2 * H], axis=-1, keepdims=True)
           + b2)
    out_ref[...] = out


def _permute_gates_t(w_t):
    """Permute transposed LSTM weight columns from (i,f,g,o) to (i,f,o,g)."""
    i, f, g, o = jnp.split(w_t, 4, axis=1)
    return jnp.concatenate([i, f, o, g], axis=1)


def init_params(key):
    """Deterministic params mirroring the PyTorch module's shapes/init scheme."""
    H = HIDDEN
    ks = jax.random.split(key, 8)
    # nn.Linear default: U(-1/sqrt(fan_in), 1/sqrt(fan_in))
    bound1 = 1.0 / (INPUT_SIZE ** 0.5)
    w1 = jax.random.uniform(ks[0], (H, INPUT_SIZE), jnp.float32, -bound1, bound1)
    b1 = jax.random.uniform(ks[1], (H,), jnp.float32, -bound1, bound1)
    # weight_ih_*: kaiming_normal_ ; weight_hh_*: orthogonal_ ; LSTM biases: 0
    kstd = (2.0 / H) ** 0.5
    wih0 = jax.random.normal(ks[2], (4 * H, H), jnp.float32) * kstd
    wih1 = jax.random.normal(ks[3], (4 * H, H), jnp.float32) * kstd
    orth = jax.nn.initializers.orthogonal()
    whh0 = orth(ks[4], (4 * H, H), jnp.float32)
    whh1 = orth(ks[5], (4 * H, H), jnp.float32)
    bound2 = 1.0 / ((NUM_LAYERS * H) ** 0.5)
    w2 = jax.random.uniform(ks[6], (OUTPUT_SIZE, NUM_LAYERS * H), jnp.float32,
                            -bound2, bound2)
    b2 = jax.random.uniform(ks[7], (OUTPUT_SIZE,), jnp.float32, -bound2, bound2)

    wih0t = _permute_gates_t(wih0.T)                       # (H, 4H)  gate cols (i,f,o,g)
    whh0t = _permute_gates_t(whh0.T)                       # (H, 4H)
    wcat1 = jnp.concatenate([_permute_gates_t(wih1.T),
                             _permute_gates_t(whh1.T)], axis=0)   # (2H, 4H)
    return {
        "w1t": w1.T,                           # (input_size, H)
        "b1": b1.reshape(1, H),                # (1, H)
        "wih0t": wih0t,                        # (H, 4H)
        "whh0t": whh0t,                        # (H, 4H)
        "wcat1": wcat1,                        # (2H, 4H)
        "w2": w2.reshape(1, NUM_LAYERS * H),   # (1, 2H)
        "b2": b2.reshape(1, OUTPUT_SIZE),      # (1, 1)
    }


def lstm_model_forward(x, params):
    """x: (B, T, input_size) batch_first, like the PyTorch module. Returns (B,)."""
    B, T, F = x.shape
    # time-major, flattened to (T*B, F): row t*B + b holds x[b, t, :]
    x_col = jnp.transpose(x, (1, 0, 2)).reshape(T * B, F).astype(jnp.float32)
    vmem = pl.BlockSpec(memory_space=pltpu.MemorySpace.VMEM)
    kernel = functools.partial(lstm_forward_kernel, T=T, B=B)
    # Single ungridded call: total VMEM footprint << limits on v5e/v6e/v7x.
    # (If B grows large, add a grid axis over B with dimension_semantics=("parallel",)
    #  to shard across v7x's two TensorCores.)
    out = pl.pallas_call(
        kernel,
        out_shape=jax.ShapeDtypeStruct((B, OUTPUT_SIZE), jnp.float32),
        in_specs=[vmem] * 8,
        out_specs=vmem,
    )(x_col, params["w1t"], params["b1"],
      params["wih0t"], params["whh0t"],
      params["wcat1"], params["w2"], params["b2"])
    # predictions[:, -1]  (output_size == 1 -> last column)
    return out[:, -1]


if __name__ == "__main__":
    key = jax.random.PRNGKey(0)
    pkey, xkey = jax.random.split(key)
    params = init_params(pkey)

    B, T = 8, 8
    x = jax.random.normal(xkey, (B, T, INPUT_SIZE), jnp.float32)

    preds = jax.jit(lstm_model_forward)(x, params)
    jax.block_until_ready(preds)
    assert preds.shape == (B,)
    print("KERNEL_OK")
</pallas_src>

<mosaic_0001>
module attributes {stable_mosaic.version = 11 : i64} {
  func.func @lstm_forward_kernel(%arg0: memref<64x1xf32, #tpu.memory_space<vmem>>, %arg1: memref<1x32xf32, #tpu.memory_space<vmem>>, %arg2: memref<1x32xf32, #tpu.memory_space<vmem>>, %arg3: memref<32x128xf32, #tpu.memory_space<vmem>>, %arg4: memref<32x128xf32, #tpu.memory_space<vmem>>, %arg5: memref<64x128xf32, #tpu.memory_space<vmem>>, %arg6: memref<1x64xf32, #tpu.memory_space<vmem>>, %arg7: memref<1x1xf32, #tpu.memory_space<vmem>>, %arg8: memref<8x1xf32, #tpu.memory_space<vmem>>) attributes {dimension_semantics = [], scalar_prefetch = 0 : i64, scratch_operands = 0 : i64, tpu.core_type = #tpu.core_type<tc>} {
    %c0 = arith.constant 0 : index
    %c0_0 = arith.constant 0 : index
    %0 = vector.load %arg0[%c0, %c0_0] : memref<64x1xf32, #tpu.memory_space<vmem>>, vector<64x1xf32>
    %c0_1 = arith.constant 0 : index
    %c0_2 = arith.constant 0 : index
    %1 = vector.load %arg1[%c0_1, %c0_2] : memref<1x32xf32, #tpu.memory_space<vmem>>, vector<1x32xf32>
    %2 = vector.broadcast %0 : vector<64x1xf32> to vector<64x32xf32>
    %3 = vector.broadcast %1 : vector<1x32xf32> to vector<64x32xf32>
    %4 = arith.mulf %2, %3 : vector<64x32xf32>
    %c0_3 = arith.constant 0 : index
    %c0_4 = arith.constant 0 : index
    %5 = vector.load %arg2[%c0_3, %c0_4] : memref<1x32xf32, #tpu.memory_space<vmem>>, vector<1x32xf32>
    %6 = vector.broadcast %5 : vector<1x32xf32> to vector<64x32xf32>
    %7 = arith.addf %4, %6 : vector<64x32xf32>
    %cst = arith.constant 0.000000e+00 : f32
    %8 = vector.broadcast %cst : f32 to vector<64x32xf32>
    %9 = arith.maximumf %7, %8 : vector<64x32xf32>
    %c0_5 = arith.constant 0 : index
    %c0_6 = arith.constant 0 : index
    %10 = vector.load %arg3[%c0_5, %c0_6] : memref<32x128xf32, #tpu.memory_space<vmem>>, vector<32x128xf32>
    %cst_7 = arith.constant dense<0.000000e+00> : vector<64x128xf32>
    %11 = tpu.matmul %9, %10, %cst_7 {dimension_numbers = #tpu.dot_dimension_numbers<[1], [0], [0], [1], [0, 0, 1, 1], [], []>} : vector<64x32xf32>, vector<32x128xf32>, vector<64x128xf32> -> vector<64x128xf32>
    %c0_8 = arith.constant 0 : index
    %c0_9 = arith.constant 0 : index
    %12 = vector.load %arg4[%c0_8, %c0_9] : memref<32x128xf32, #tpu.memory_space<vmem>>, vector<32x128xf32>
    %c0_10 = arith.constant 0 : index
    %c0_11 = arith.constant 0 : index
    %13 = vector.load %arg5[%c0_10, %c0_11] : memref<64x128xf32, #tpu.memory_space<vmem>>, vector<64x128xf32>
    %c0_12 = arith.constant 0 : index
    %c0_13 = arith.constant 0 : index
    %14 = vector.load %arg6[%c0_12, %c0_13] : memref<1x64xf32, #tpu.memory_space<vmem>>, vector<1x64xf32>
    %c0_14 = arith.constant 0 : index
    %c0_15 = arith.constant 0 : index
    %15 = vector.load %arg7[%c0_14, %c0_15] : memref<1x1xf32, #tpu.memory_space<vmem>>, vector<1x1xf32>
    %cst_16 = arith.constant 0.000000e+00 : f32
    %16 = vector.broadcast %cst_16 : f32 to vector<8x32xf32>
    %17 = vector.extract_strided_slice %11 {offsets = [0, 0], sizes = [8, 128], strides = [1, 1]} : vector<64x128xf32> to vector<8x128xf32>
    %cst_17 = arith.constant dense<0.000000e+00> : vector<8x128xf32>
    %18 = tpu.matmul %16, %12, %cst_17 {dimension_numbers = #tpu.dot_dimension_numbers<[1], [0], [0], [1], [0, 0, 1, 1], [], []>} : vector<8x32xf32>, vector<32x128xf32>, vector<8x128xf32> -> vector<8x128xf32>
    %19 = arith.addf %17, %18 : vector<8x128xf32>
    %20 = vector.extract_strided_slice %19 {offsets = [0, 0], sizes = [8, 96], strides = [1, 1]} : vector<8x128xf32> to vector<8x96xf32>
    %21 = arith.negf %20 : vector<8x96xf32>
    %22 = math.exp %21 : vector<8x96xf32>
    %cst_18 = arith.constant 1.000000e+00 : f32
    %23 = vector.broadcast %cst_18 : f32 to vector<8x96xf32>
    %24 = arith.addf %23, %22 : vector<8x96xf32>
    %25 = arith.divf %23, %24 : vector<8x96xf32>
    %26 = vector.extract_strided_slice %19 {offsets = [0, 96], sizes = [8, 32], strides = [1, 1]} : vector<8x128xf32> to vector<8x32xf32>
    %27 = math.tanh %26 : vector<8x32xf32>
    %28 = vector.extract_strided_slice %25 {offsets = [0, 0], sizes = [8, 32], strides = [1, 1]} : vector<8x96xf32> to vector<8x32xf32>
    %29 = vector.extract_strided_slice %25 {offsets = [0, 32], sizes = [8, 32], strides = [1, 1]} : vector<8x96xf32> to vector<8x32xf32>
    %30 = vector.extract_strided_slice %25 {offsets = [0, 64], sizes = [8, 32], strides = [1, 1]} : vector<8x96xf32> to vector<8x32xf32>
    %31 = arith.mulf %29, %16 : vector<8x32xf32>
    %32 = arith.mulf %28, %27 : vector<8x32xf32>
    %33 = arith.addf %31, %32 : vector<8x32xf32>
    %34 = math.tanh %33 : vector<8x32xf32>
    %35 = arith.mulf %30, %34 : vector<8x32xf32>
    %36 = tpu.concatenate %35, %16 in 1 : vector<8x32xf32>, vector<8x32xf32> -> vector<8x64xf32>
    %cst_19 = arith.constant dense<0.000000e+00> : vector<8x128xf32>
    %37 = tpu.matmul %36, %13, %cst_19 {dimension_numbers = #tpu.dot_dimension_numbers<[1], [0], [0], [1], [0, 0, 1, 1], [], []>} : vector<8x64xf32>, vector<64x128xf32>, vector<8x128xf32> -> vector<8x128xf32>
    %38 = vector.extract_strided_slice %37 {offsets = [0, 0], sizes = [8, 96], strides = [1, 1]} : vector<8x128xf32> to vector<8x96xf32>
    %39 = arith.negf %38 : vector<8x96xf32>
    %40 = math.exp %39 : vector<8x96xf32>
    %cst_20 = arith.constant 1.000000e+00 : f32
    %41 = vector.broadcast %cst_20 : f32 to vector<8x96xf32>
    %42 = arith.addf %41, %40 : vector<8x96xf32>
    %43 = arith.divf %41, %42 : vector<8x96xf32>
    %44 = vector.extract_strided_slice %37 {offsets = [0, 96], sizes = [8, 32], strides = [1, 1]} : vector<8x128xf32> to vector<8x32xf32>
    %45 = math.tanh %44 : vector<8x32xf32>
    %46 = vector.extract_strided_slice %43 {offsets = [0, 0], sizes = [8, 32], strides = [1, 1]} : vector<8x96xf32> to vector<8x32xf32>
    %47 = vector.extract_strided_slice %43 {offsets = [0, 32], sizes = [8, 32], strides = [1, 1]} : vector<8x96xf32> to vector<8x32xf32>
    %48 = vector.extract_strided_slice %43 {offsets = [0, 64], sizes = [8, 32], strides = [1, 1]} : vector<8x96xf32> to vector<8x32xf32>
    %49 = arith.mulf %47, %16 : vector<8x32xf32>
    %50 = arith.mulf %46, %45 : vector<8x32xf32>
    %51 = arith.addf %49, %50 : vector<8x32xf32>
    %52 = math.tanh %51 : vector<8x32xf32>
    %53 = arith.mulf %48, %52 : vector<8x32xf32>
    %54 = vector.extract_strided_slice %11 {offsets = [8, 0], sizes = [8, 128], strides = [1, 1]} : vector<64x128xf32> to vector<8x128xf32>
    %cst_21 = arith.constant dense<0.000000e+00> : vector<8x128xf32>
    %55 = tpu.matmul %35, %12, %cst_21 {dimension_numbers = #tpu.dot_dimension_numbers<[1], [0], [0], [1], [0, 0, 1, 1], [], []>} : vector<8x32xf32>, vector<32x128xf32>, vector<8x128xf32> -> vector<8x128xf32>
    %56 = arith.addf %54, %55 : vector<8x128xf32>
    %57 = vector.extract_strided_slice %56 {offsets = [0, 0], sizes = [8, 96], strides = [1, 1]} : vector<8x128xf32> to vector<8x96xf32>
    %58 = arith.negf %57 : vector<8x96xf32>
    %59 = math.exp %58 : vector<8x96xf32>
    %cst_22 = arith.constant 1.000000e+00 : f32
    %60 = vector.broadcast %cst_22 : f32 to vector<8x96xf32>
    %61 = arith.addf %60, %59 : vector<8x96xf32>
    %62 = arith.divf %60, %61 : vector<8x96xf32>
    %63 = vector.extract_strided_slice %56 {offsets = [0, 96], sizes = [8, 32], strides = [1, 1]} : vector<8x128xf32> to vector<8x32xf32>
    %64 = math.tanh %63 : vector<8x32xf32>
    %65 = vector.extract_strided_slice %62 {offsets = [0, 0], sizes = [8, 32], strides = [1, 1]} : vector<8x96xf32> to vector<8x32xf32>
    %66 = vector.extract_strided_slice %62 {offsets = [0, 32], sizes = [8, 32], strides = [1, 1]} : vector<8x96xf32> to vector<8x32xf32>
    %67 = vector.extract_strided_slice %62 {offsets = [0, 64], sizes = [8, 32], strides = [1, 1]} : vector<8x96xf32> to vector<8x32xf32>
    %68 = arith.mulf %66, %33 : vector<8x32xf32>
    %69 = arith.mulf %65, %64 : vector<8x32xf32>
    %70 = arith.addf %68, %69 : vector<8x32xf32>
    %71 = math.tanh %70 : vector<8x32xf32>
    %72 = arith.mulf %67, %71 : vector<8x32xf32>
    %73 = tpu.concatenate %72, %53 in 1 : vector<8x32xf32>, vector<8x32xf32> -> vector<8x64xf32>
    %cst_23 = arith.constant dense<0.000000e+00> : vector<8x128xf32>
    %74 = tpu.matmul %73, %13, %cst_23 {dimension_numbers = #tpu.dot_dimension_numbers<[1], [0], [0], [1], [0, 0, 1, 1], [], []>} : vector<8x64xf32>, vector<64x128xf32>, vector<8x128xf32> -> vector<8x128xf32>
    %75 = vector.extract_strided_slice %74 {offsets = [0, 0], sizes = [8, 96], strides = [1, 1]} : vector<8x128xf32> to vector<8x96xf32>
    %76 = arith.negf %75 : vector<8x96xf32>
    %77 = math.exp %76 : vector<8x96xf32>
    %cst_24 = arith.constant 1.000000e+00 : f32
    %78 = vector.broadcast %cst_24 : f32 to vector<8x96xf32>
    %79 = arith.addf %78, %77 : vector<8x96xf32>
    %80 = arith.divf %78, %79 : vector<8x96xf32>
    %81 = vector.extract_strided_slice %74 {offsets = [0, 96], sizes = [8, 32], strides = [1, 1]} : vector<8x128xf32> to vector<8x32xf32>
    %82 = math.tanh %81 : vector<8x32xf32>
    %83 = vector.extract_strided_slice %80 {offsets = [0, 0], sizes = [8, 32], strides = [1, 1]} : vector<8x96xf32> to vector<8x32xf32>
    %84 = vector.extract_strided_slice %80 {offsets = [0, 32], sizes = [8, 32], strides = [1, 1]} : vector<8x96xf32> to vector<8x32xf32>
    %85 = vector.extract_strided_slice %80 {offsets = [0, 64], sizes = [8, 32], strides = [1, 1]} : vector<8x96xf32> to vector<8x32xf32>
    %86 = arith.mulf %84, %51 : vector<8x32xf32>
    %87 = arith.mulf %83, %82 : vector<8x32xf32>
    %88 = arith.addf %86, %87 : vector<8x32xf32>
    %89 = math.tanh %88 : vector<8x32xf32>
    %90 = arith.mulf %85, %89 : vector<8x32xf32>
    %91 = vector.extract_strided_slice %11 {offsets = [16, 0], sizes = [8, 128], strides = [1, 1]} : vector<64x128xf32> to vector<8x128xf32>
    %cst_25 = arith.constant dense<0.000000e+00> : vector<8x128xf32>
    %92 = tpu.matmul %72, %12, %cst_25 {dimension_numbers = #tpu.dot_dimension_numbers<[1], [0], [0], [1], [0, 0, 1, 1], [], []>} : vector<8x32xf32>, vector<32x128xf32>, vector<8x128xf32> -> vector<8x128xf32>
    %93 = arith.addf %91, %92 : vector<8x128xf32>
    %94 = vector.extract_strided_slice %93 {offsets = [0, 0], sizes = [8, 96], strides = [1, 1]} : vector<8x128xf32> to vector<8x96xf32>
    %95 = arith.negf %94 : vector<8x96xf32>
    %96 = math.exp %95 : vector<8x96xf32>
    %cst_26 = arith.constant 1.000000e+00 : f32
    %97 = vector.broadcast %cst_26 : f32 to vector<8x96xf32>
    %98 = arith.addf %97, %96 : vector<8x96xf32>
    %99 = arith.divf %97, %98 : vector<8x96xf32>
    %100 = vector.extract_strided_slice %93 {offsets = [0, 96], sizes = [8, 32], strides = [1, 1]} : vector<8x128xf32> to vector<8x32xf32>
    %101 = math.tanh %100 : vector<8x32xf32>
    %102 = vector.extract_strided_slice %99 {offsets = [0, 0], sizes = [8, 32], strides = [1, 1]} : vector<8x96xf32> to vector<8x32xf32>
    %103 = vector.extract_strided_slice %99 {offsets = [0, 32], sizes = [8, 32], strides = [1, 1]} : vector<8x96xf32> to vector<8x32xf32>
    %104 = vector.extract_strided_slice %99 {offsets = [0, 64], sizes = [8, 32], strides = [1, 1]} : vector<8x96xf32> to vector<8x32xf32>
    %105 = arith.mulf %103, %70 : vector<8x32xf32>
    %106 = arith.mulf %102, %101 : vector<8x32xf32>
    %107 = arith.addf %105, %106 : vector<8x32xf32>
    %108 = math.tanh %107 : vector<8x32xf32>
    %109 = arith.mulf %104, %108 : vector<8x32xf32>
    %110 = tpu.concatenate %109, %90 in 1 : vector<8x32xf32>, vector<8x32xf32> -> vector<8x64xf32>
    %cst_27 = arith.constant dense<0.000000e+00> : vector<8x128xf32>
    %111 = tpu.matmul %110, %13, %cst_27 {dimension_numbers = #tpu.dot_dimension_numbers<[1], [0], [0], [1], [0, 0, 1, 1], [], []>} : vector<8x64xf32>, vector<64x128xf32>, vector<8x128xf32> -> vector<8x128xf32>
    %112 = vector.extract_strided_slice %111 {offsets = [0, 0], sizes = [8, 96], strides = [1, 1]} : vector<8x128xf32> to vector<8x96xf32>
    %113 = arith.negf %112 : vector<8x96xf32>
    %114 = math.exp %113 : vector<8x96xf32>
    %cst_28 = arith.constant 1.000000e+00 : f32
    %115 = vector.broadcast %cst_28 : f32 to vector<8x96xf32>
    %116 = arith.addf %115, %114 : vector<8x96xf32>
    %117 = arith.divf %115, %116 : vector<8x96xf32>
    %118 = vector.extract_strided_slice %111 {offsets = [0, 96], sizes = [8, 32], strides = [1, 1]} : vector<8x128xf32> to vector<8x32xf32>
    %119 = math.tanh %118 : vector<8x32xf32>
    %120 = vector.extract_strided_slice %117 {offsets = [0, 0], sizes = [8, 32], strides = [1, 1]} : vector<8x96xf32> to vector<8x32xf32>
    %121 = vector.extract_strided_slice %117 {offsets = [0, 32], sizes = [8, 32], strides = [1, 1]} : vector<8x96xf32> to vector<8x32xf32>
    %122 = vector.extract_strided_slice %117 {offsets = [0, 64], sizes = [8, 32], strides = [1, 1]} : vector<8x96xf32> to vector<8x32xf32>
    %123 = arith.mulf %121, %88 : vector<8x32xf32>
    %124 = arith.mulf %120, %119 : vector<8x32xf32>
    %125 = arith.addf %123, %124 : vector<8x32xf32>
    %126 = math.tanh %125 : vector<8x32xf32>
    %127 = arith.mulf %122, %126 : vector<8x32xf32>
    %128 = vector.extract_strided_slice %11 {offsets = [24, 0], sizes = [8, 128], strides = [1, 1]} : vector<64x128xf32> to vector<8x128xf32>
    %cst_29 = arith.constant dense<0.000000e+00> : vector<8x128xf32>
    %129 = tpu.matmul %109, %12, %cst_29 {dimension_numbers = #tpu.dot_dimension_numbers<[1], [0], [0], [1], [0, 0, 1, 1], [], []>} : vector<8x32xf32>, vector<32x128xf32>, vector<8x128xf32> -> vector<8x128xf32>
    %130 = arith.addf %128, %129 : vector<8x128xf32>
    %131 = vector.extract_strided_slice %130 {offsets = [0, 0], sizes = [8, 96], strides = [1, 1]} : vector<8x128xf32> to vector<8x96xf32>
    %132 = arith.negf %131 : vector<8x96xf32>
    %133 = math.exp %132 : vector<8x96xf32>
    %cst_30 = arith.constant 1.000000e+00 : f32
    %134 = vector.broadcast %cst_30 : f32 to vector<8x96xf32>
    %135 = arith.addf %134, %133 : vector<8x96xf32>
    %136 = arith.divf %134, %135 : vector<8x96xf32>
    %137 = vector.extract_strided_slice %130 {offsets = [0, 96], sizes = [8, 32], strides = [1, 1]} : vector<8x128xf32> to vector<8x32xf32>
    %138 = math.tanh %137 : vector<8x32xf32>
    %139 = vector.extract_strided_slice %136 {offsets = [0, 0], sizes = [8, 32], strides = [1, 1]} : vector<8x96xf32> to vector<8x32xf32>
    %140 = vector.extract_strided_slice %136 {offsets = [0, 32], sizes = [8, 32], strides = [1, 1]} : vector<8x96xf32> to vector<8x32xf32>
    %141 = vector.extract_strided_slice %136 {offsets = [0, 64], sizes = [8, 32], strides = [1, 1]} : vector<8x96xf32> to vector<8x32xf32>
    %142 = arith.mulf %140, %107 : vector<8x32xf32>
    %143 = arith.mulf %139, %138 : vector<8x32xf32>
    %144 = arith.addf %142, %143 : vector<8x32xf32>
    %145 = math.tanh %144 : vector<8x32xf32>
    %146 = arith.mulf %141, %145 : vector<8x32xf32>
    %147 = tpu.concatenate %146, %127 in 1 : vector<8x32xf32>, vector<8x32xf32> -> vector<8x64xf32>
    %cst_31 = arith.constant dense<0.000000e+00> : vector<8x128xf32>
    %148 = tpu.matmul %147, %13, %cst_31 {dimension_numbers = #tpu.dot_dimension_numbers<[1], [0], [0], [1], [0, 0, 1, 1], [], []>} : vector<8x64xf32>, vector<64x128xf32>, vector<8x128xf32> -> vector<8x128xf32>
    %149 = vector.extract_strided_slice %148 {offsets = [0, 0], sizes = [8, 96], strides = [1, 1]} : vector<8x128xf32> to vector<8x96xf32>
    %150 = arith.negf %149 : vector<8x96xf32>
    %151 = math.exp %150 : vector<8x96xf32>
    %cst_32 = arith.constant 1.000000e+00 : f32
    %152 = vector.broadcast %cst_32 : f32 to vector<8x96xf32>
    %153 = arith.addf %152, %151 : vector<8x96xf32>
    %154 = arith.divf %152, %153 : vector<8x96xf32>
    %155 = vector.extract_strided_slice %148 {offsets = [0, 96], sizes = [8, 32], strides = [1, 1]} : vector<8x128xf32> to vector<8x32xf32>
    %156 = math.tanh %155 : vector<8x32xf32>
    %157 = vector.extract_strided_slice %154 {offsets = [0, 0], sizes = [8, 32], strides = [1, 1]} : vector<8x96xf32> to vector<8x32xf32>
    %158 = vector.extract_strided_slice %154 {offsets = [0, 32], sizes = [8, 32], strides = [1, 1]} : vector<8x96xf32> to vector<8x32xf32>
    %159 = vector.extract_strided_slice %154 {offsets = [0, 64], sizes = [8, 32], strides = [1, 1]} : vector<8x96xf32> to vector<8x32xf32>
    %160 = arith.mulf %158, %125 : vector<8x32xf32>
    %161 = arith.mulf %157, %156 : vector<8x32xf32>
    %162 = arith.addf %160, %161 : vector<8x32xf32>
    %163 = math.tanh %162 : vector<8x32xf32>
    %164 = arith.mulf %159, %163 : vector<8x32xf32>
    %165 = vector.extract_strided_slice %11 {offsets = [32, 0], sizes = [8, 128], strides = [1, 1]} : vector<64x128xf32> to vector<8x128xf32>
    %cst_33 = arith.constant dense<0.000000e+00> : vector<8x128xf32>
    %166 = tpu.matmul %146, %12, %cst_33 {dimension_numbers = #tpu.dot_dimension_numbers<[1], [0], [0], [1], [0, 0, 1, 1], [], []>} : vector<8x32xf32>, vector<32x128xf32>, vector<8x128xf32> -> vector<8x128xf32>
    %167 = arith.addf %165, %166 : vector<8x128xf32>
    %168 = vector.extract_strided_slice %167 {offsets = [0, 0], sizes = [8, 96], strides = [1, 1]} : vector<8x128xf32> to vector<8x96xf32>
    %169 = arith.negf %168 : vector<8x96xf32>
    %170 = math.exp %169 : vector<8x96xf32>
    %cst_34 = arith.constant 1.000000e+00 : f32
    %171 = vector.broadcast %cst_34 : f32 to vector<8x96xf32>
    %172 = arith.addf %171, %170 : vector<8x96xf32>
    %173 = arith.divf %171, %172 : vector<8x96xf32>
    %174 = vector.extract_strided_slice %167 {offsets = [0, 96], sizes = [8, 32], strides = [1, 1]} : vector<8x128xf32> to vector<8x32xf32>
    %175 = math.tanh %174 : vector<8x32xf32>
    %176 = vector.extract_strided_slice %173 {offsets = [0, 0], sizes = [8, 32], strides = [1, 1]} : vector<8x96xf32> to vector<8x32xf32>
    %177 = vector.extract_strided_slice %173 {offsets = [0, 32], sizes = [8, 32], strides = [1, 1]} : vector<8x96xf32> to vector<8x32xf32>
    %178 = vector.extract_strided_slice %173 {offsets = [0, 64], sizes = [8, 32], strides = [1, 1]} : vector<8x96xf32> to vector<8x32xf32>
    %179 = arith.mulf %177, %144 : vector<8x32xf32>
    %180 = arith.mulf %176, %175 : vector<8x32xf32>
    %181 = arith.addf %179, %180 : vector<8x32xf32>
    %182 = math.tanh %181 : vector<8x32xf32>
    %183 = arith.mulf %178, %182 : vector<8x32xf32>
    %184 = tpu.concatenate %183, %164 in 1 : vector<8x32xf32>, vector<8x32xf32> -> vector<8x64xf32>
    %cst_35 = arith.constant dense<0.000000e+00> : vector<8x128xf32>
    %185 = tpu.matmul %184, %13, %cst_35 {dimension_numbers = #tpu.dot_dimension_numbers<[1], [0], [0], [1], [0, 0, 1, 1], [], []>} : vector<8x64xf32>, vector<64x128xf32>, vector<8x128xf32> -> vector<8x128xf32>
    %186 = vector.extract_strided_slice %185 {offsets = [0, 0], sizes = [8, 96], strides = [1, 1]} : vector<8x128xf32> to vector<8x96xf32>
    %187 = arith.negf %186 : vector<8x96xf32>
    %188 = math.exp %187 : vector<8x96xf32>
    %cst_36 = arith.constant 1.000000e+00 : f32
    %189 = vector.broadcast %cst_36 : f32 to vector<8x96xf32>
    %190 = arith.addf %189, %188 : vector<8x96xf32>
    %191 = arith.divf %189, %190 : vector<8x96xf32>
    %192 = vector.extract_strided_slice %185 {offsets = [0, 96], sizes = [8, 32], strides = [1, 1]} : vector<8x128xf32> to vector<8x32xf32>
    %193 = math.tanh %192 : vector<8x32xf32>
    %194 = vector.extract_strided_slice %191 {offsets = [0, 0], sizes = [8, 32], strides = [1, 1]} : vector<8x96xf32> to vector<8x32xf32>
    %195 = vector.extract_strided_slice %191 {offsets = [0, 32], sizes = [8, 32], strides = [1, 1]} : vector<8x96xf32> to vector<8x32xf32>
    %196 = vector.extract_strided_slice %191 {offsets = [0, 64], sizes = [8, 32], strides = [1, 1]} : vector<8x96xf32> to vector<8x32xf32>
    %197 = arith.mulf %195, %162 : vector<8x32xf32>
    %198 = arith.mulf %194, %193 : vector<8x32xf32>
    %199 = arith.addf %197, %198 : vector<8x32xf32>
    %200 = math.tanh %199 : vector<8x32xf32>
    %201 = arith.mulf %196, %200 : vector<8x32xf32>
    %202 = vector.extract_strided_slice %11 {offsets = [40, 0], sizes = [8, 128], strides = [1, 1]} : vector<64x128xf32> to vector<8x128xf32>
    %cst_37 = arith.constant dense<0.000000e+00> : vector<8x128xf32>
    %203 = tpu.matmul %183, %12, %cst_37 {dimension_numbers = #tpu.dot_dimension_numbers<[1], [0], [0], [1], [0, 0, 1, 1], [], []>} : vector<8x32xf32>, vector<32x128xf32>, vector<8x128xf32> -> vector<8x128xf32>
    %204 = arith.addf %202, %203 : vector<8x128xf32>
    %205 = vector.extract_strided_slice %204 {offsets = [0, 0], sizes = [8, 96], strides = [1, 1]} : vector<8x128xf32> to vector<8x96xf32>
    %206 = arith.negf %205 : vector<8x96xf32>
    %207 = math.exp %206 : vector<8x96xf32>
    %cst_38 = arith.constant 1.000000e+00 : f32
    %208 = vector.broadcast %cst_38 : f32 to vector<8x96xf32>
    %209 = arith.addf %208, %207 : vector<8x96xf32>
    %210 = arith.divf %208, %209 : vector<8x96xf32>
    %211 = vector.extract_strided_slice %204 {offsets = [0, 96], sizes = [8, 32], strides = [1, 1]} : vector<8x128xf32> to vector<8x32xf32>
    %212 = math.tanh %211 : vector<8x32xf32>
    %213 = vector.extract_strided_slice %210 {offsets = [0, 0], sizes = [8, 32], strides = [1, 1]} : vector<8x96xf32> to vector<8x32xf32>
    %214 = vector.extract_strided_slice %210 {offsets = [0, 32], sizes = [8, 32], strides = [1, 1]} : vector<8x96xf32> to vector<8x32xf32>
    %215 = vector.extract_strided_slice %210 {offsets = [0, 64], sizes = [8, 32], strides = [1, 1]} : vector<8x96xf32> to vector<8x32xf32>
    %216 = arith.mulf %214, %181 : vector<8x32xf32>
    %217 = arith.mulf %213, %212 : vector<8x32xf32>
    %218 = arith.addf %216, %217 : vector<8x32xf32>
    %219 = math.tanh %218 : vector<8x32xf32>
    %220 = arith.mulf %215, %219 : vector<8x32xf32>
    %221 = tpu.concatenate %220, %201 in 1 : vector<8x32xf32>, vector<8x32xf32> -> vector<8x64xf32>
    %cst_39 = arith.constant dense<0.000000e+00> : vector<8x128xf32>
    %222 = tpu.matmul %221, %13, %cst_39 {dimension_numbers = #tpu.dot_dimension_numbers<[1], [0], [0], [1], [0, 0, 1, 1], [], []>} : vector<8x64xf32>, vector<64x128xf32>, vector<8x128xf32> -> vector<8x128xf32>
    %223 = vector.extract_strided_slice %222 {offsets = [0, 0], sizes = [8, 96], strides = [1, 1]} : vector<8x128xf32> to vector<8x96xf32>
    %224 = arith.negf %223 : vector<8x96xf32>
    %225 = math.exp %224 : vector<8x96xf32>
    %cst_40 = arith.constant 1.000000e+00 : f32
    %226 = vector.broadcast %cst_40 : f32 to vector<8x96xf32>
    %227 = arith.addf %226, %225 : vector<8x96xf32>
    %228 = arith.divf %226, %227 : vector<8x96xf32>
    %229 = vector.extract_strided_slice %222 {offsets = [0, 96], sizes = [8, 32], strides = [1, 1]} : vector<8x128xf32> to vector<8x32xf32>
    %230 = math.tanh %229 : vector<8x32xf32>
    %231 = vector.extract_strided_slice %228 {offsets = [0, 0], sizes = [8, 32], strides = [1, 1]} : vector<8x96xf32> to vector<8x32xf32>
    %232 = vector.extract_strided_slice %228 {offsets = [0, 32], sizes = [8, 32], strides = [1, 1]} : vector<8x96xf32> to vector<8x32xf32>
    %233 = vector.extract_strided_slice %228 {offsets = [0, 64], sizes = [8, 32], strides = [1, 1]} : vector<8x96xf32> to vector<8x32xf32>
    %234 = arith.mulf %232, %199 : vector<8x32xf32>
    %235 = arith.mulf %231, %230 : vector<8x32xf32>
    %236 = arith.addf %234, %235 : vector<8x32xf32>
    %237 = math.tanh %236 : vector<8x32xf32>
    %238 = arith.mulf %233, %237 : vector<8x32xf32>
    %239 = vector.extract_strided_slice %11 {offsets = [48, 0], sizes = [8, 128], strides = [1, 1]} : vector<64x128xf32> to vector<8x128xf32>
    %cst_41 = arith.constant dense<0.000000e+00> : vector<8x128xf32>
    %240 = tpu.matmul %220, %12, %cst_41 {dimension_numbers = #tpu.dot_dimension_numbers<[1], [0], [0], [1], [0, 0, 1, 1], [], []>} : vector<8x32xf32>, vector<32x128xf32>, vector<8x128xf32> -> vector<8x128xf32>
    %241 = arith.addf %239, %240 : vector<8x128xf32>
    %242 = vector.extract_strided_slice %241 {offsets = [0, 0], sizes = [8, 96], strides = [1, 1]} : vector<8x128xf32> to vector<8x96xf32>
    %243 = arith.negf %242 : vector<8x96xf32>
    %244 = math.exp %243 : vector<8x96xf32>
    %cst_42 = arith.constant 1.000000e+00 : f32
    %245 = vector.broadcast %cst_42 : f32 to vector<8x96xf32>
    %246 = arith.addf %245, %244 : vector<8x96xf32>
    %247 = arith.divf %245, %246 : vector<8x96xf32>
    %248 = vector.extract_strided_slice %241 {offsets = [0, 96], sizes = [8, 32], strides = [1, 1]} : vector<8x128xf32> to vector<8x32xf32>
    %249 = math.tanh %248 : vector<8x32xf32>
    %250 = vector.extract_strided_slice %247 {offsets = [0, 0], sizes = [8, 32], strides = [1, 1]} : vector<8x96xf32> to vector<8x32xf32>
    %251 = vector.extract_strided_slice %247 {offsets = [0, 32], sizes = [8, 32], strides = [1, 1]} : vector<8x96xf32> to vector<8x32xf32>
    %252 = vector.extract_strided_slice %247 {offsets = [0, 64], sizes = [8, 32], strides = [1, 1]} : vector<8x96xf32> to vector<8x32xf32>
    %253 = arith.mulf %251, %218 : vector<8x32xf32>
    %254 = arith.mulf %250, %249 : vector<8x32xf32>
    %255 = arith.addf %253, %254 : vector<8x32xf32>
    %256 = math.tanh %255 : vector<8x32xf32>
    %257 = arith.mulf %252, %256 : vector<8x32xf32>
    %258 = tpu.concatenate %257, %238 in 1 : vector<8x32xf32>, vector<8x32xf32> -> vector<8x64xf32>
    %cst_43 = arith.constant dense<0.000000e+00> : vector<8x128xf32>
    %259 = tpu.matmul %258, %13, %cst_43 {dimension_numbers = #tpu.dot_dimension_numbers<[1], [0], [0], [1], [0, 0, 1, 1], [], []>} : vector<8x64xf32>, vector<64x128xf32>, vector<8x128xf32> -> vector<8x128xf32>
    %260 = vector.extract_strided_slice %259 {offsets = [0, 0], sizes = [8, 96], strides = [1, 1]} : vector<8x128xf32> to vector<8x96xf32>
    %261 = arith.negf %260 : vector<8x96xf32>
    %262 = math.exp %261 : vector<8x96xf32>
    %cst_44 = arith.constant 1.000000e+00 : f32
    %263 = vector.broadcast %cst_44 : f32 to vector<8x96xf32>
    %264 = arith.addf %263, %262 : vector<8x96xf32>
    %265 = arith.divf %263, %264 : vector<8x96xf32>
    %266 = vector.extract_strided_slice %259 {offsets = [0, 96], sizes = [8, 32], strides = [1, 1]} : vector<8x128xf32> to vector<8x32xf32>
    %267 = math.tanh %266 : vector<8x32xf32>
    %268 = vector.extract_strided_slice %265 {offsets = [0, 0], sizes = [8, 32], strides = [1, 1]} : vector<8x96xf32> to vector<8x32xf32>
    %269 = vector.extract_strided_slice %265 {offsets = [0, 32], sizes = [8, 32], strides = [1, 1]} : vector<8x96xf32> to vector<8x32xf32>
    %270 = vector.extract_strided_slice %265 {offsets = [0, 64], sizes = [8, 32], strides = [1, 1]} : vector<8x96xf32> to vector<8x32xf32>
    %271 = arith.mulf %269, %236 : vector<8x32xf32>
    %272 = arith.mulf %268, %267 : vector<8x32xf32>
    %273 = arith.addf %271, %272 : vector<8x32xf32>
    %274 = math.tanh %273 : vector<8x32xf32>
    %275 = arith.mulf %270, %274 : vector<8x32xf32>
    %276 = vector.extract_strided_slice %11 {offsets = [56, 0], sizes = [8, 128], strides = [1, 1]} : vector<64x128xf32> to vector<8x128xf32>
    %cst_45 = arith.constant dense<0.000000e+00> : vector<8x128xf32>
    %277 = tpu.matmul %257, %12, %cst_45 {dimension_numbers = #tpu.dot_dimension_numbers<[1], [0], [0], [1], [0, 0, 1, 1], [], []>} : vector<8x32xf32>, vector<32x128xf32>, vector<8x128xf32> -> vector<8x128xf32>
    %278 = arith.addf %276, %277 : vector<8x128xf32>
    %279 = vector.extract_strided_slice %278 {offsets = [0, 0], sizes = [8, 96], strides = [1, 1]} : vector<8x128xf32> to vector<8x96xf32>
    %280 = arith.negf %279 : vector<8x96xf32>
    %281 = math.exp %280 : vector<8x96xf32>
    %cst_46 = arith.constant 1.000000e+00 : f32
    %282 = vector.broadcast %cst_46 : f32 to vector<8x96xf32>
    %283 = arith.addf %282, %281 : vector<8x96xf32>
    %284 = arith.divf %282, %283 : vector<8x96xf32>
    %285 = vector.extract_strided_slice %278 {offsets = [0, 96], sizes = [8, 32], strides = [1, 1]} : vector<8x128xf32> to vector<8x32xf32>
    %286 = math.tanh %285 : vector<8x32xf32>
    %287 = vector.extract_strided_slice %284 {offsets = [0, 0], sizes = [8, 32], strides = [1, 1]} : vector<8x96xf32> to vector<8x32xf32>
    %288 = vector.extract_strided_slice %284 {offsets = [0, 32], sizes = [8, 32], strides = [1, 1]} : vector<8x96xf32> to vector<8x32xf32>
    %289 = vector.extract_strided_slice %284 {offsets = [0, 64], sizes = [8, 32], strides = [1, 1]} : vector<8x96xf32> to vector<8x32xf32>
    %290 = arith.mulf %288, %255 : vector<8x32xf32>
    %291 = arith.mulf %287, %286 : vector<8x32xf32>
    %292 = arith.addf %290, %291 : vector<8x32xf32>
    %293 = math.tanh %292 : vector<8x32xf32>
    %294 = arith.mulf %289, %293 : vector<8x32xf32>
    %295 = tpu.concatenate %294, %275 in 1 : vector<8x32xf32>, vector<8x32xf32> -> vector<8x64xf32>
    %cst_47 = arith.constant dense<0.000000e+00> : vector<8x128xf32>
    %296 = tpu.matmul %295, %13, %cst_47 {dimension_numbers = #tpu.dot_dimension_numbers<[1], [0], [0], [1], [0, 0, 1, 1], [], []>} : vector<8x64xf32>, vector<64x128xf32>, vector<8x128xf32> -> vector<8x128xf32>
    %297 = vector.extract_strided_slice %296 {offsets = [0, 0], sizes = [8, 96], strides = [1, 1]} : vector<8x128xf32> to vector<8x96xf32>
    %298 = arith.negf %297 : vector<8x96xf32>
    %299 = math.exp %298 : vector<8x96xf32>
    %cst_48 = arith.constant 1.000000e+00 : f32
    %300 = vector.broadcast %cst_48 : f32 to vector<8x96xf32>
    %301 = arith.addf %300, %299 : vector<8x96xf32>
    %302 = arith.divf %300, %301 : vector<8x96xf32>
    %303 = vector.extract_strided_slice %296 {offsets = [0, 96], sizes = [8, 32], strides = [1, 1]} : vector<8x128xf32> to vector<8x32xf32>
    %304 = math.tanh %303 : vector<8x32xf32>
    %305 = vector.extract_strided_slice %302 {offsets = [0, 0], sizes = [8, 32], strides = [1, 1]} : vector<8x96xf32> to vector<8x32xf32>
    %306 = vector.extract_strided_slice %302 {offsets = [0, 32], sizes = [8, 32], strides = [1, 1]} : vector<8x96xf32> to vector<8x32xf32>
    %307 = vector.extract_strided_slice %302 {offsets = [0, 64], sizes = [8, 32], strides = [1, 1]} : vector<8x96xf32> to vector<8x32xf32>
    %308 = arith.mulf %306, %273 : vector<8x32xf32>
    %309 = arith.mulf %305, %304 : vector<8x32xf32>
    %310 = arith.addf %308, %309 : vector<8x32xf32>
    %311 = math.tanh %310 : vector<8x32xf32>
    %312 = arith.mulf %307, %311 : vector<8x32xf32>
    %313 = vector.extract_strided_slice %14 {offsets = [0, 0], sizes = [1, 32], strides = [1, 1]} : vector<1x64xf32> to vector<1x32xf32>
    %314 = vector.broadcast %313 : vector<1x32xf32> to vector<8x32xf32>
    %315 = arith.mulf %294, %314 : vector<8x32xf32>
    %cst_49 = arith.constant dense<0.000000e+00> : vector<8xf32>
    %316 = vector.multi_reduction <add>, %315, %cst_49 [1] : vector<8x32xf32> to vector<8xf32>
    %317 = vector.shape_cast %316 : vector<8xf32> to vector<8x1xf32>
    %318 = vector.extract_strided_slice %14 {offsets = [0, 32], sizes = [1, 32], strides = [1, 1]} : vector<1x64xf32> to vector<1x32xf32>
    %319 = vector.broadcast %318 : vector<1x32xf32> to vector<8x32xf32>
    %320 = arith.mulf %312, %319 : vector<8x32xf32>
    %cst_50 = arith.constant dense<0.000000e+00> : vector<8xf32>
    %321 = vector.multi_reduction <add>, %320, %cst_50 [1] : vector<8x32xf32> to vector<8xf32>
    %322 = vector.shape_cast %321 : vector<8xf32> to vector<8x1xf32>
    %323 = arith.addf %317, %322 : vector<8x1xf32>
    %324 = vector.broadcast %15 : vector<1x1xf32> to vector<8x1xf32>
    %325 = arith.addf %323, %324 : vector<8x1xf32>
    %c0_51 = arith.constant 0 : index
    %c0_52 = arith.constant 0 : index
    %326 = vector.load %arg8[%c0_51, %c0_52] : memref<8x1xf32, #tpu.memory_space<vmem>>, vector<8x1xf32>
    tpu.vector_store %arg8[%c0_51, %c0_52], %325 {strides = array<i32>} : memref<8x1xf32, #tpu.memory_space<vmem>>, vector<8x1xf32>,
    return
  }
}

</mosaic_0001>

<llo_original>
// kernel: lstm_model_forward.1
$region0: #{lstm_model_forward.1}
  #allocation0 [shape = 'u32[]', space=smem, size = 0x4, offset = 0x4, fixed_abs, tag = 'smem constant byte address 0x4 - core index']
  #allocation1 [shape = 'u32[144,128]{1,0:T(1,128)}', space=vmem, size = 0x12000, scoped, tag = 'internal scratch']
  #allocation2 [shape = 'f32[1,1]{1,0:T(1,128)S(1)}', space=vmem, size = 0x200, scoped, tag = 'scoped memory for lstm_model_forward.1']
  %s0 = inlined_call_operand.vmem [shape: f32[64,1], index: 0, kind: input, shape index: {}]
  %s1 = inlined_call_operand.vmem [shape: f32[1,32], index: 1, kind: input, shape index: {}]
  %s2 = inlined_call_operand.vmem [shape: f32[1,32], index: 2, kind: input, shape index: {}]
  %s3 = inlined_call_operand.vmem [shape: f32[32,128], index: 3, kind: input, shape index: {}]
  %s4 = inlined_call_operand.hbm [shape: f32[32,128], index: 4, kind: input, shape index: {}]
  %s5 = inlined_call_operand.vmem [shape: f32[64,128], index: 5, kind: input, shape index: {}]
  %s6 = inlined_call_operand.vmem [shape: f32[1,64], index: 6, kind: input, shape index: {}]
  %s7 = inlined_call_operand.<no memory space> [shape: f32[1,1], index: 7, kind: input, shape index: {}]
  %s8 = inlined_call_operand.vmem [shape: f32[8,1], index: 8, kind: output, shape index: {}]
  %s9 = sld [smem:[#allocation0]]
  $region46: #{lstm_model_forward.1} parent=0
    _
  %s11 = ssub.s32 1, %s9
  %s12 = scalar_select 0, %s11, %s9
  %v13 = vstv %s7
  %14 = vst [vmem:[#allocation2] sm:$0x1] %v13
  $region1: #{lstm_model_forward.1} parent=0
    #allocation3 [shape = 'u8[16384]{0}', space=vmem, size = 0x4000, scoped, tag = 'input window, operand 4, single buffered']
    #allocation4 [shape = 's32[1]{0}', space=sflag, size = 0x4, scoped, tag = 'scoped memory for lstm_model_forward.1']
    %15 = vsyncpa [#allocation4], 0
    // Predicated region
    $region2: #{lstm_model_forward.1} parent=1 // pred_check
      _
    $region3: #{lstm_model_forward.1} parent=1 // pred_check_branch
      %17 = sbr.rel (0) target = $region5
    $region4: #{lstm_model_forward.1} parent=1 // pred_region
      _
    $region5: #{lstm_model_forward.1} parent=1 // pred_fallthru
      _
    // Predicated region
    $region6: #{lstm_model_forward.1} parent=1 // pred_check
      _
    $region7: #{lstm_model_forward.1} parent=1 // pred_check_branch
      %19 = sbr.rel (0) target = $region9
    $region8: #{lstm_model_forward.1} parent=1 // pred_region
      _
    $region9: #{lstm_model_forward.1} parent=1 // pred_fallthru
      _
    // Predicated region
    $region10: #{lstm_model_forward.1} parent=1 // pred_check
      _
    $region11: #{lstm_model_forward.1} parent=1 // pred_check_branch
      %21 = sbr.rel (0) target = $region13
    $region12: #{lstm_model_forward.1} parent=1 // pred_region
      _
    $region13: #{lstm_model_forward.1} parent=1 // pred_fallthru
      _
    // Predicated region
    $region14: #{lstm_model_forward.1} parent=1 // pred_check
      _
    $region15: #{lstm_model_forward.1} parent=1 // pred_check_branch
      %23 = sbr.rel (0) target = $region17
    $region16: #{lstm_model_forward.1} parent=1 // pred_region
      _
    $region17: #{lstm_model_forward.1} parent=1 // pred_fallthru
      _
    // Predicated region
    $region18: #{lstm_model_forward.1} parent=1 // pred_check
      _
    $region19: #{lstm_model_forward.1} parent=1 // pred_check_branch
      %25 = sbr.rel (0) target = $region21
    $region20: #{lstm_model_forward.1} parent=1 // pred_region
      %s27 = ssub.s32 512, 512
      %28 = vsyncadd [#allocation4], %s27
      %s29 = sshll.u32 [#allocation3], 4
      %s30 = int_to_ptr.vmem [resolvable:$true] %s29
      %35 = dma.hbm_to_vmem [thread:$0]  %s4, 512, %s30, [#allocation4], 128, 128, 8
    $region21: #{lstm_model_forward.1} parent=1 // pred_fallthru
      _
    // Predicated region
    $region22: #{lstm_model_forward.1} parent=1 // pred_check
      _
    $region23: #{lstm_model_forward.1} parent=1 // pred_check_branch
      %37 = sbr.rel (0) target = $region25
    $region24: #{lstm_model_forward.1} parent=1 // pred_region
      _
    $region25: #{lstm_model_forward.1} parent=1 // pred_fallthru
      _
    // Predicated region
    $region26: #{lstm_model_forward.1} parent=1 // pred_check
      _
    $region27: #{lstm_model_forward.1} parent=1 // pred_check_branch
      %39 = sbr.rel (0) target = $region29
    $region28: #{lstm_model_forward.1} parent=1 // pred_region
      _
    $region29: #{lstm_model_forward.1} parent=1 // pred_fallthru
      _
    // Predicated region
    $region30: #{lstm_model_forward.1} parent=1 // pred_check
      _
    $region31: #{lstm_model_forward.1} parent=1 // pred_check_branch
      %41 = sbr.rel (0) target = $region33
    $region32: #{lstm_model_forward.1} parent=1 // pred_region
      _
    $region33: #{lstm_model_forward.1} parent=1 // pred_fallthru
      _
    // Predicated region
    $region34: #{lstm_model_forward.1} parent=1 // pred_check
      _
    $region35: #{lstm_model_forward.1} parent=1 // pred_check_branch
      %43 = sbr.rel (0) target = $region37
    $region36: #{lstm_model_forward.1} parent=1 // pred_region
      %44 = dma.done [#allocation4], 512
    $region37: #{lstm_model_forward.1} parent=1 // pred_fallthru
      _
    %v45 = vld [vmem:[%s0] sm:$0xff]
    %v46 = vld [vmem:[%s0 + $0x8] sm:$0xff]
    %v47 = vld [vmem:[%s0 + $0x10] sm:$0xff]
    %v48 = vld [vmem:[%s0 + $0x18] sm:$0xff]
    %v49 = vld [vmem:[%s0 + $0x20] sm:$0xff]
    %v50 = vld [vmem:[%s0 + $0x28] sm:$0xff]
    %v51 = vld [vmem:[%s0 + $0x30] sm:$0xff]
    %v52 = vld [vmem:[%s0 + $0x38] sm:$0xff]
    %v53 = vld [vmem:[%s1] sm:$0x1]
    %55 = vset.pattern.permute.xlu0 0
    %56 = vperm.xlu0 %55, %v45
    %v57 = vpop.permute.xlu0 %56
    %60 = vset.pattern.permute.xlu0 0
    %61 = vperm.xlu0 %60, %v46
    %v62 = vpop.permute.xlu0 %61
    %65 = vset.pattern.permute.xlu0 0
    %66 = vperm.xlu0 %65, %v47
    %v67 = vpop.permute.xlu0 %66
    %70 = vset.pattern.permute.xlu0 0
    %71 = vperm.xlu0 %70, %v48
    %v72 = vpop.permute.xlu0 %71
    %75 = vset.pattern.permute.xlu0 0
    %76 = vperm.xlu0 %75, %v49
    %v77 = vpop.permute.xlu0 %76
    %80 = vset.pattern.permute.xlu0 0
    %81 = vperm.xlu0 %80, %v50
    %v82 = vpop.permute.xlu0 %81
    %85 = vset.pattern.permute.xlu0 0
    %86 = vperm.xlu0 %85, %v51
    %v87 = vpop.permute.xlu0 %86
    %90 = vset.pattern.permute.xlu0 0
    %91 = vperm.xlu0 %90, %v52
    %v92 = vpop.permute.xlu0 %91
    %v95 = vlaneseq
    %v96 = vshrl.u32 %v95, 7
    %v97 = vsub.s32 0, %v96
    %v98 = vrot.slane %v53, %v97
    %v100 = vmul.f32 %v57, %v98
    %v101 = vmul.f32 %v62, %v98
    %v102 = vmul.f32 %v67, %v98
    %v103 = vmul.f32 %v72, %v98
    %v104 = vmul.f32 %v77, %v98
    %v105 = vmul.f32 %v82, %v98
    %v106 = vmul.f32 %v87, %v98
    %v107 = vmul.f32 %v92, %v98
    %v108 = vld [vmem:[%s2] sm:$0x1]
    %v110 = vlaneseq
    %v111 = vshrl.u32 %v110, 7
    %v112 = vsub.s32 0, %v111
    %v113 = vrot.slane %v108, %v112
    %v115 = vadd.f32 %v100, %v113
    %v116 = vadd.f32 %v101, %v113
    %v117 = vadd.f32 %v102, %v113
    %v118 = vadd.f32 %v103, %v113
    %v119 = vadd.f32 %v104, %v113
    %v120 = vadd.f32 %v105, %v113
    %v121 = vadd.f32 %v106, %v113
    %v122 = vadd.f32 %v107, %v113
    %v123 = vmax.f32 %v115, 0.0
    %v124 = vmax.f32 %v116, 0.0
    %v125 = vmax.f32 %v117, 0.0
    %v126 = vmax.f32 %v118, 0.0
    %v127 = vmax.f32 %v119, 0.0
    %v128 = vmax.f32 %v120, 0.0
    %v129 = vmax.f32 %v121, 0.0
    %v130 = vmax.f32 %v122, 0.0
    %v131 = vld [vmem:[%s3] sm:$0xff]
    %v132 = vld [vmem:[%s3 + $0x8] sm:$0xff]
    %v133 = vld [vmem:[%s3 + $0x10] sm:$0xff]
    %v134 = vld [vmem:[%s3 + $0x18] sm:$0xff]
    %vm135 = vcmask 261120
    %v137 = vsel %vm135, %v123, 0
    %v140 = vsel %vm135, %v124, 0
    %v143 = vsel %vm135, %v125, 0
    %v146 = vsel %vm135, %v126, 0
    %v149 = vsel %vm135, %v127, 0
    %v152 = vsel %vm135, %v128, 0
    %v155 = vsel %vm135, %v129, 0
    %v158 = vsel %vm135, %v130, 0
    %160 = vmatprep.subr.mxu0 0.0
    %161 = vmatpush1.msra.mxu0 %v131
    %162 = vmatprep.subr.mxu0 0.0
    %163 = vmatpush1.msra.mxu0 %v132
    %164 = vmatprep.subr.mxu0 0.0
    %165 = vmatpush1.msra.mxu0 %v133
    %166 = vmatprep.subr.mxu0 0.0
    %167 = vmatpush1.msra.mxu0 %v134
    %168 = vmatprep.subr.mxu0 0.0
    %169 = vmatpush1.msra.mxu0 0.0
    %170 = vmatprep.subr.mxu0 0.0
    %171 = vmatpush1.msra.mxu0 0.0
    %172 = vmatprep.subr.mxu0 0.0
    %173 = vmatpush1.msra.mxu0 0.0
    %174 = vmatprep.subr.mxu0 0.0
    %175 = vmatpush1.msra.mxu0 0.0
    %176 = vmatprep.subr.mxu0 0.0
    %177 = vmatpush1.msra.mxu0 0.0
    %178 = vmatprep.subr.mxu0 0.0
    %179 = vmatpush1.msra.mxu0 0.0
    %180 = vmatprep.subr.mxu0 0.0
    %181 = vmatpush1.msra.mxu0 0.0
    %182 = vmatprep.subr.mxu0 0.0
    %183 = vmatpush1.msra.mxu0 0.0
    %184 = vmatprep.subr.mxu0 0.0
    %185 = vmatpush1.msra.mxu0 0.0
    %186 = vmatprep.subr.mxu0 0.0
    %187 = vmatpush1.msra.mxu0 0.0
    %188 = vmatprep.subr.mxu0 0.0
    %189 = vmatpush1.msra.mxu0 0.0
    %190 = vmatprep.subr.mxu0 0.0
    %191 = vmatpush1.msra.mxu0 0.0
    %192 = vmatprep.subr.mxu0 0.0
    %193 = vmatpush1.msra.mxu0 0.0
    %194 = vmatprep.subr.mxu0 0.0
    %195 = vmatpush1.msra.mxu0 0.0
    %196 = vmatprep.subr.mxu0 0.0
    %197 = vmatpush1.msra.mxu0 0.0
    %198 = vmatprep.subr.mxu0 0.0
    %199 = vmatpush1.msra.mxu0 0.0
    %200 = vmatprep.subr.mxu0 0.0
    %201 = vmatpush1.msra.mxu0 0.0
    %202 = vmatprep.subr.mxu0 0.0
    %203 = vmatpush1.msra.mxu0 0.0
    %204 = vmatprep.subr.mxu0 0.0
    %205 = vmatpush1.msra.mxu0 0.0
    %206 = vmatprep.subr.mxu0 0.0
    %207 = vmatpush1.msra.mxu0 0.0
    %208 = vmatprep.subr.mxu0 0.0
    %209 = vmatpush1.msra.mxu0 0.0
    %210 = vmatprep.subr.mxu0 0.0
    %211 = vmatpush1.msra.mxu0 0.0
    %212 = vmatprep.subr.mxu0 0.0
    %213 = vmatpush1.msra.mxu0 0.0
    %214 = vmatprep.subr.mxu0 0.0
    %215 = vmatpush1.msra.mxu0 0.0
    %216 = vmatprep.subr.mxu0 0.0
    %217 = vmatpush1.msra.mxu0 0.0
    %218 = vmatprep.subr.mxu0 0.0
    %219 = vmatpush1.msra.mxu0 0.0
    %220 = vmatprep.subr.mxu0 0.0
    %221 = vmatpush1.msra.mxu0 0.0
    %222 = vmatprep.subr.mxu0 0.0
    %223 = vmatpush1.msra.mxu0 0.0
    %224 = vmatprep.mubr.f32.mxu0 0.0
    %225 = vmatmul.mubr.f32.gmra.mrb[0].mxu0 %v137
    %v226 = vpop.f32.mrb[0].mxu0
    %v227 = vadd.f32 0.0, %v226
    %v228 = vpop.f32.mrb[0].mxu0
    %229 = vmatprep.mubr.f32.mxu0 0.0
    %230 = vmatmul.mubr.f32.gmra.mrb[0].mxu0 %v140
    %v231 = vpop.f32.mrb[0].mxu0
    %v232 = vadd.f32 0.0, %v231
    %v233 = vpop.f32.mrb[0].mxu0
    %234 = vmatprep.mubr.f32.mxu0 0.0
    %235 = vmatmul.mubr.f32.gmra.mrb[0].mxu0 %v143
    %v236 = vpop.f32.mrb[0].mxu0
    %v237 = vadd.f32 0.0, %v236
    %v238 = vpop.f32.mrb[0].mxu0
    %239 = vmatprep.mubr.f32.mxu0 0.0
    %240 = vmatmul.mubr.f32.gmra.mrb[0].mxu0 %v146
    %v241 = vpop.f32.mrb[0].mxu0
    %v242 = vadd.f32 0.0, %v241
    %v243 = vpop.f32.mrb[0].mxu0
    %244 = vmatprep.mubr.f32.mxu0 0.0
    %245 = vmatmul.mubr.f32.gmra.mrb[0].mxu0 %v149
    %v246 = vpop.f32.mrb[0].mxu0
    %v247 = vadd.f32 0.0, %v246
    %v248 = vpop.f32.mrb[0].mxu0
    %249 = vmatprep.mubr.f32.mxu0 0.0
    %250 = vmatmul.mubr.f32.gmra.mrb[0].mxu0 %v152
    %v251 = vpop.f32.mrb[0].mxu0
    %v252 = vadd.f32 0.0, %v251
    %v253 = vpop.f32.mrb[0].mxu0
    %254 = vmatprep.mubr.f32.mxu0 0.0
    %255 = vmatmul.mubr.f32.gmra.mrb[0].mxu0 %v155
    %v256 = vpop.f32.mrb[0].mxu0
    %v257 = vadd.f32 0.0, %v256
    %v258 = vpop.f32.mrb[0].mxu0
    %259 = vmatprep.mubr.f32.mxu0 0.0
    %260 = vmatmul.mubr.f32.gmra.mrb[0].mxu0 %v158
    %v261 = vpop.f32.mrb[0].mxu0
    %v262 = vadd.f32 0.0, %v261
    %v263 = vpop.f32.mrb[0].mxu0
    %264 = vdwg.mxu0
    %v265 = vld [vmem:[#allocation3] sm:$0xff]
    %v266 = vld [vmem:[#allocation3 + $0x8] sm:$0xff]
    %v267 = vld [vmem:[#allocation3 + $0x10] sm:$0xff]
    %v268 = vld [vmem:[#allocation3 + $0x18] sm:$0xff]
    %v269 = vld [vmem:[%s5] sm:$0xff]
    %v270 = vld [vmem:[%s5 + $0x8] sm:$0xff]
    %v271 = vld [vmem:[%s5 + $0x10] sm:$0xff]
    %v272 = vld [vmem:[%s5 + $0x18] sm:$0xff]
    %v273 = vld [vmem:[%s5 + $0x20] sm:$0xff]
    %v274 = vld [vmem:[%s5 + $0x28] sm:$0xff]
    %v275 = vld [vmem:[%s5 + $0x30] sm:$0xff]
    %v276 = vld [vmem:[%s5 + $0x38] sm:$0xff]
    %v277 = vld [vmem:[%s6] sm:$0x1]
    %v278 = vld [vmem:[#allocation2] sm:$0x1]
    %v280 = vsel %vm135, 0.0, 0
    %282 = vmatprep.subr.mxu0 0.0
    %283 = vmatpush1.msra.mxu0 %v265
    %284 = vmatprep.subr.mxu0 0.0
    %285 = vmatpush1.msra.mxu0 %v266
    %286 = vmatprep.subr.mxu0 0.0
    %287 = vmatpush1.msra.mxu0 %v267
    %288 = vmatprep.subr.mxu0 0.0
    %289 = vmatpush1.msra.mxu0 %v268
    %290 = vmatprep.subr.mxu0 0.0
    %291 = vmatpush1.msra.mxu0 0.0
    %292 = vmatprep.subr.mxu0 0.0
    %293 = vmatpush1.msra.mxu0 0.0
    %294 = vmatprep.subr.mxu0 0.0
    %295 = vmatpush1.msra.mxu0 0.0
    %296 = vmatprep.subr.mxu0 0.0
    %297 = vmatpush1.msra.mxu0 0.0
    %298 = vmatprep.subr.mxu0 0.0
    %299 = vmatpush1.msra.mxu0 0.0
    %300 = vmatprep.subr.mxu0 0.0
    %301 = vmatpush1.msra.mxu0 0.0
    %302 = vmatprep.subr.mxu0 0.0
    %303 = vmatpush1.msra.mxu0 0.0
    %304 = vmatprep.subr.mxu0 0.0
    %305 = vmatpush1.msra.mxu0 0.0
    %306 = vmatprep.subr.mxu0 0.0
    %307 = vmatpush1.msra.mxu0 0.0
    %308 = vmatprep.subr.mxu0 0.0
    %309 = vmatpush1.msra.mxu0 0.0
    %310 = vmatprep.subr.mxu0 0.0
    %311 = vmatpush1.msra.mxu0 0.0
    %312 = vmatprep.subr.mxu0 0.0
    %313 = vmatpush1.msra.mxu0 0.0
    %314 = vmatprep.subr.mxu0 0.0
    %315 = vmatpush1.msra.mxu0 0.0
    %316 = vmatprep.subr.mxu0 0.0
    %317 = vmatpush1.msra.mxu0 0.0
    %318 = vmatprep.subr.mxu0 0.0
    %319 = vmatpush1.msra.mxu0 0.0
    %320 = vmatprep.subr.mxu0 0.0
    %321 = vmatpush1.msra.mxu0 0.0
    %322 = vmatprep.subr.mxu0 0.0
    %323 = vmatpush1.msra.mxu0 0.0
    %324 = vmatprep.subr.mxu0 0.0
    %325 = vmatpush1.msra.mxu0 0.0
    %326 = vmatprep.subr.mxu0 0.0
    %327 = vmatpush1.msra.mxu0 0.0
    %328 = vmatprep.subr.mxu0 0.0
    %329 = vmatpush1.msra.mxu0 0.0
    %330 = vmatprep.subr.mxu0 0.0
    %331 = vmatpush1.msra.mxu0 0.0
    %332 = vmatprep.subr.mxu0 0.0
    %333 = vmatpush1.msra.mxu0 0.0
    %334 = vmatprep.subr.mxu0 0.0
    %335 = vmatpush1.msra.mxu0 0.0
    %336 = vmatprep.subr.mxu0 0.0
    %337 = vmatpush1.msra.mxu0 0.0
    %338 = vmatprep.subr.mxu0 0.0
    %339 = vmatpush1.msra.mxu0 0.0
    %340 = vmatprep.subr.mxu0 0.0
    %341 = vmatpush1.msra.mxu0 0.0
    %342 = vmatprep.subr.mxu0 0.0
    %343 = vmatpush1.msra.mxu0 0.0
    %344 = vmatprep.subr.mxu0 0.0
    %345 = vmatpush1.msra.mxu0 0.0
    %346 = vmatprep.mubr.f32.mxu0 0.0
    %347 = vmatmul.mubr.f32.gmra.mrb[0].mxu0 %v280
    %v348 = vpop.f32.mrb[0].mxu0
    %v349 = vadd.f32 0.0, %v348
    %v350 = vpop.f32.mrb[0].mxu0
    %351 = vdwg.mxu0
    %v352 = vadd.f32 %v227, %v349
    %v353 = vxor.u32 %v352, 2147483648
    %v354 = vmul.f32 %v353, 1.442695
    %v355 = vpow.pop %v354
    %v356 = vadd.f32 %v355, 1.0
    %v357 = vrcp.pop %v356
    %v358 = vmul.f32 1.0, %v357
    %v359 = vtanh.pop %v352
    %v360 = vmul.f32 %v358, 0.0
    %362 = vrot.lane.b32.xlu0 %v359, 32
    %v363 = vpop.permute.xlu0 %362
    %v365 = vmul.f32 %v358, %v363
    %367 = vrot.lane.b32.xlu0 %v365, 32
    %v368 = vpop.permute.xlu0 %367
    %v370 = vadd.f32 %v360, %v368
    %v371 = vtanh.pop %v370
    %373 = vrot.lane.b32.xlu0 %v371, 32
    %v374 = vpop.permute.xlu0 %373
    %v376 = vmul.f32 %v358, %v374
    %378 = vrot.lane.b32.xlu0 %v376, 64
    %v379 = vpop.permute.xlu0 %378
    %v381 = vsel %vm135, %v379, 0.0
    %vm382 = vcmask 523264
    %v384 = vsel %vm382, %v381, 0
    %386 = vmatprep.subr.mxu0 0.0
    %387 = vmatpush1.msra.mxu0 %v269
    %388 = vmatprep.subr.mxu0 0.0
    %389 = vmatpush1.msra.mxu0 %v270
    %390 = vmatprep.subr.mxu0 0.0
    %391 = vmatpush1.msra.mxu0 %v271
    %392 = vmatprep.subr.mxu0 0.0
    %393 = vmatpush1.msra.mxu0 %v272
    %394 = vmatprep.subr.mxu0 0.0
    %395 = vmatpush1.msra.mxu0 %v273
    %396 = vmatprep.subr.mxu0 0.0
    %397 = vmatpush1.msra.mxu0 %v274
    %398 = vmatprep.subr.mxu0 0.0
    %399 = vmatpush1.msra.mxu0 %v275
    %400 = vmatprep.subr.mxu0 0.0
    %401 = vmatpush1.msra.mxu0 %v276
    %402 = vmatprep.subr.mxu0 0.0
    %403 = vmatpush1.msra.mxu0 0.0
    %404 = vmatprep.subr.mxu0 0.0
    %405 = vmatpush1.msra.mxu0 0.0
    %406 = vmatprep.subr.mxu0 0.0
    %407 = vmatpush1.msra.mxu0 0.0
    %408 = vmatprep.subr.mxu0 0.0
    %409 = vmatpush1.msra.mxu0 0.0
    %410 = vmatprep.subr.mxu0 0.0
    %411 = vmatpush1.msra.mxu0 0.0
    %412 = vmatprep.subr.mxu0 0.0
    %413 = vmatpush1.msra.mxu0 0.0
    %414 = vmatprep.subr.mxu0 0.0
    %415 = vmatpush1.msra.mxu0 0.0
    %416 = vmatprep.subr.mxu0 0.0
    %417 = vmatpush1.msra.mxu0 0.0
    %418 = vmatprep.subr.mxu0 0.0
    %419 = vmatpush1.msra.mxu0 0.0
    %420 = vmatprep.subr.mxu0 0.0
    %421 = vmatpush1.msra.mxu0 0.0
    %422 = vmatprep.subr.mxu0 0.0
    %423 = vmatpush1.msra.mxu0 0.0
    %424 = vmatprep.subr.mxu0 0.0
    %425 = vmatpush1.msra.mxu0 0.0
    %426 = vmatprep.subr.mxu0 0.0
    %427 = vmatpush1.msra.mxu0 0.0
    %428 = vmatprep.subr.mxu0 0.0
    %429 = vmatpush1.msra.mxu0 0.0
    %430 = vmatprep.subr.mxu0 0.0
    %431 = vmatpush1.msra.mxu0 0.0
    %432 = vmatprep.subr.mxu0 0.0
    %433 = vmatpush1.msra.mxu0 0.0
    %434 = vmatprep.subr.mxu0 0.0
    %435 = vmatpush1.msra.mxu0 0.0
    %436 = vmatprep.subr.mxu0 0.0
    %437 = vmatpush1.msra.mxu0 0.0
    %438 = vmatprep.subr.mxu0 0.0
    %439 = vmatpush1.msra.mxu0 0.0
    %440 = vmatprep.subr.mxu0 0.0
    %441 = vmatpush1.msra.mxu0 0.0
    %442 = vmatprep.subr.mxu0 0.0
    %443 = vmatpush1.msra.mxu0 0.0
    %444 = vmatprep.subr.mxu0 0.0
    %445 = vmatpush1.msra.mxu0 0.0
    %446 = vmatprep.subr.mxu0 0.0
    %447 = vmatpush1.msra.mxu0 0.0
    %448 = vmatprep.subr.mxu0 0.0
    %449 = vmatpush1.msra.mxu0 0.0
    %450 = vmatprep.mubr.f32.mxu0 0.0
    %451 = vmatmul.mubr.f32.gmra.mrb[0].mxu0 %v384
    %v452 = vpop.f32.mrb[0].mxu0
    %v453 = vadd.f32 0.0, %v452
    %v454 = vpop.f32.mrb[0].mxu0
    %455 = vdwg.mxu0
    %v456 = vxor.u32 %v453, 2147483648
    %v457 = vmul.f32 %v456, 1.442695
    %v458 = vpow.pop %v457
    %v459 = vadd.f32 %v458, 1.0
    %v460 = vrcp.pop %v459
    %v461 = vmul.f32 1.0, %v460
    %v462 = vtanh.pop %v453
    %v463 = vmul.f32 %v461, 0.0
    %465 = vrot.lane.b32.xlu0 %v462, 32
    %v466 = vpop.permute.xlu0 %465
    %v468 = vmul.f32 %v461, %v466
    %470 = vrot.lane.b32.xlu0 %v468, 32
    %v471 = vpop.permute.xlu0 %470
    %v473 = vadd.f32 %v463, %v471
    %v474 = vtanh.pop %v473
    %476 = vrot.lane.b32.xlu0 %v474, 32
    %v477 = vpop.permute.xlu0 %476
    %v479 = vmul.f32 %v461, %v477
    %v480 = vsel %vm135, %v379, 0
    %482 = vmatprep.subr.mxu0 0.0
    %483 = vmatpush1.msra.mxu0 %v265
    %484 = vmatprep.subr.mxu0 0.0
    %485 = vmatpush1.msra.mxu0 %v266
    %486 = vmatprep.subr.mxu0 0.0
    %487 = vmatpush1.msra.mxu0 %v267
    %488 = vmatprep.subr.mxu0 0.0
    %489 = vmatpush1.msra.mxu0 %v268
    %490 = vmatprep.subr.mxu0 0.0
    %491 = vmatpush1.msra.mxu0 0.0
    %492 = vmatprep.subr.mxu0 0.0
    %493 = vmatpush1.msra.mxu0 0.0
    %494 = vmatprep.subr.mxu0 0.0
    %495 = vmatpush1.msra.mxu0 0.0
    %496 = vmatprep.subr.mxu0 0.0
    %497 = vmatpush1.msra.mxu0 0.0
    %498 = vmatprep.subr.mxu0 0.0
    %499 = vmatpush1.msra.mxu0 0.0
    %500 = vmatprep.subr.mxu0 0.0
    %501 = vmatpush1.msra.mxu0 0.0
    %502 = vmatprep.subr.mxu0 0.0
    %503 = vmatpush1.msra.mxu0 0.0
    %504 = vmatprep.subr.mxu0 0.0
    %505 = vmatpush1.msra.mxu0 0.0
    %506 = vmatprep.subr.mxu0 0.0
    %507 = vmatpush1.msra.mxu0 0.0
    %508 = vmatprep.subr.mxu0 0.0
    %509 = vmatpush1.msra.mxu0 0.0
    %510 = vmatprep.subr.mxu0 0.0
    %511 = vmatpush1.msra.mxu0 0.0
    %512 = vmatprep.subr.mxu0 0.0
    %513 = vmatpush1.msra.mxu0 0.0
    %514 = vmatprep.subr.mxu0 0.0
    %515 = vmatpush1.msra.mxu0 0.0
    %516 = vmatprep.subr.mxu0 0.0
    %517 = vmatpush1.msra.mxu0 0.0
    %518 = vmatprep.subr.mxu0 0.0
    %519 = vmatpush1.msra.mxu0 0.0
    %520 = vmatprep.subr.mxu0 0.0
    %521 = vmatpush1.msra.mxu0 0.0
    %522 = vmatprep.subr.mxu0 0.0
    %523 = vmatpush1.msra.mxu0 0.0
    %524 = vmatprep.subr.mxu0 0.0
    %525 = vmatpush1.msra.mxu0 0.0
    %526 = vmatprep.subr.mxu0 0.0
    %527 = vmatpush1.msra.mxu0 0.0
    %528 = vmatprep.subr.mxu0 0.0
    %529 = vmatpush1.msra.mxu0 0.0
    %530 = vmatprep.subr.mxu0 0.0
    %531 = vmatpush1.msra.mxu0 0.0
    %532 = vmatprep.subr.mxu0 0.0
    %533 = vmatpush1.msra.mxu0 0.0
    %534 = vmatprep.subr.mxu0 0.0
    %535 = vmatpush1.msra.mxu0 0.0
    %536 = vmatprep.subr.mxu0 0.0
    %537 = vmatpush1.msra.mxu0 0.0
    %538 = vmatprep.subr.mxu0 0.0
    %539 = vmatpush1.msra.mxu0 0.0
    %540 = vmatprep.subr.mxu0 0.0
    %541 = vmatpush1.msra.mxu0 0.0
    %542 = vmatprep.subr.mxu0 0.0
    %543 = vmatpush1.msra.mxu0 0.0
    %544 = vmatprep.subr.mxu0 0.0
    %545 = vmatpush1.msra.mxu0 0.0
    %546 = vmatprep.mubr.f32.mxu0 0.0
    %547 = vmatmul.mubr.f32.gmra.mrb[0].mxu0 %v480
    %v548 = vpop.f32.mrb[0].mxu0
    %v549 = vadd.f32 0.0, %v548
    %v550 = vpop.f32.mrb[0].mxu0
    %551 = vdwg.mxu0
    %v552 = vadd.f32 %v232, %v549
    %v553 = vxor.u32 %v552, 2147483648
    %v554 = vmul.f32 %v553, 1.442695
    %v555 = vpow.pop %v554
    %v556 = vadd.f32 %v555, 1.0
    %v557 = vrcp.pop %v556
    %v558 = vmul.f32 1.0, %v557
    %v559 = vtanh.pop %v552
    %v560 = vmul.f32 %v558, %v370
    %562 = vrot.lane.b32.xlu0 %v559, 32
    %v563 = vpop.permute.xlu0 %562
    %v565 = vmul.f32 %v558, %v563
    %567 = vrot.lane.b32.xlu0 %v565, 32
    %v568 = vpop.permute.xlu0 %567
    %v570 = vadd.f32 %v560, %v568
    %v571 = vtanh.pop %v570
    %573 = vrot.lane.b32.xlu0 %v571, 32
    %v574 = vpop.permute.xlu0 %573
    %v576 = vmul.f32 %v558, %v574
    %578 = vrot.lane.b32.xlu0 %v576, 64
    %v579 = vpop.permute.xlu0 %578
    %582 = vrot.lane.b32.xlu0 %v479, 96
    %v583 = vpop.permute.xlu0 %582
    %v585 = vsel %vm135, %v579, %v583
    %v587 = vsel %vm382, %v585, 0
    %589 = vmatprep.subr.mxu0 0.0
    %590 = vmatpush1.msra.mxu0 %v269
    %591 = vmatprep.subr.mxu0 0.0
    %592 = vmatpush1.msra.mxu0 %v270
    %593 = vmatprep.subr.mxu0 0.0
    %594 = vmatpush1.msra.mxu0 %v271
    %595 = vmatprep.subr.mxu0 0.0
    %596 = vmatpush1.msra.mxu0 %v272
    %597 = vmatprep.subr.mxu0 0.0
    %598 = vmatpush1.msra.mxu0 %v273
    %599 = vmatprep.subr.mxu0 0.0
    %600 = vmatpush1.msra.mxu0 %v274
    %601 = vmatprep.subr.mxu0 0.0
    %602 = vmatpush1.msra.mxu0 %v275
    %603 = vmatprep.subr.mxu0 0.0
    %604 = vmatpush1.msra.mxu0 %v276
    %605 = vmatprep.subr.mxu0 0.0
    %606 = vmatpush1.msra.mxu0 0.0
    %607 = vmatprep.subr.mxu0 0.0
    %608 = vmatpush1.msra.mxu0 0.0
    %609 = vmatprep.subr.mxu0 0.0
    %610 = vmatpush1.msra.mxu0 0.0
    %611 = vmatprep.subr.mxu0 0.0
    %612 = vmatpush1.msra.mxu0 0.0
    %613 = vmatprep.subr.mxu0 0.0
    %614 = vmatpush1.msra.mxu0 0.0
    %615 = vmatprep.subr.mxu0 0.0
    %616 = vmatpush1.msra.mxu0 0.0
    %617 = vmatprep.subr.mxu0 0.0
    %618 = vmatpush1.msra.mxu0 0.0
    %619 = vmatprep.subr.mxu0 0.0
    %620 = vmatpush1.msra.mxu0 0.0
    %621 = vmatprep.subr.mxu0 0.0
    %622 = vmatpush1.msra.mxu0 0.0
    %623 = vmatprep.subr.mxu0 0.0
    %624 = vmatpush1.msra.mxu0 0.0
    %625 = vmatprep.subr.mxu0 0.0
    %626 = vmatpush1.msra.mxu0 0.0
    %627 = vmatprep.subr.mxu0 0.0
    %628 = vmatpush1.msra.mxu0 0.0
    %629 = vmatprep.subr.mxu0 0.0
    %630 = vmatpush1.msra.mxu0 0.0
    %631 = vmatprep.subr.mxu0 0.0
    %632 = vmatpush1.msra.mxu0 0.0
    %633 = vmatprep.subr.mxu0 0.0
    %634 = vmatpush1.msra.mxu0 0.0
    %635 = vmatprep.subr.mxu0 0.0
    %636 = vmatpush1.msra.mxu0 0.0
    %637 = vmatprep.subr.mxu0 0.0
    %638 = vmatpush1.msra.mxu0 0.0
    %639 = vmatprep.subr.mxu0 0.0
    %640 = vmatpush1.msra.mxu0 0.0
    %641 = vmatprep.subr.mxu0 0.0
    %642 = vmatpush1.msra.mxu0 0.0
    %643 = vmatprep.subr.mxu0 0.0
    %644 = vmatpush1.msra.mxu0 0.0
    %645 = vmatprep.subr.mxu0 0.0
    %646 = vmatpush1.msra.mxu0 0.0
    %647 = vmatprep.subr.mxu0 0.0
    %648 = vmatpush1.msra.mxu0 0.0
    %649 = vmatprep.subr.mxu0 0.0
    %650 = vmatpush1.msra.mxu0 0.0
    %651 = vmatprep.subr.mxu0 0.0
    %652 = vmatpush1.msra.mxu0 0.0
    %653 = vmatprep.mubr.f32.mxu0 0.0
    %654 = vmatmul.mubr.f32.gmra.mrb[0].mxu0 %v587
    %v655 = vpop.f32.mrb[0].mxu0
    %v656 = vadd.f32 0.0, %v655
    %v657 = vpop.f32.mrb[0].mxu0
    %658 = vdwg.mxu0
    %v659 = vxor.u32 %v656, 2147483648
    %v660 = vmul.f32 %v659, 1.442695
    %v661 = vpow.pop %v660
    %v662 = vadd.f32 %v661, 1.0
    %v663 = vrcp.pop %v662
    %v664 = vmul.f32 1.0, %v663
    %v665 = vtanh.pop %v656
    %v666 = vmul.f32 %v664, %v473
    %668 = vrot.lane.b32.xlu0 %v665, 32
    %v669 = vpop.permute.xlu0 %668
    %v671 = vmul.f32 %v664, %v669
    %673 = vrot.lane.b32.xlu0 %v671, 32
    %v674 = vpop.permute.xlu0 %673
    %v676 = vadd.f32 %v666, %v674
    %v677 = vtanh.pop %v676
    %679 = vrot.lane.b32.xlu0 %v677, 32
    %v680 = vpop.permute.xlu0 %679
    %v682 = vmul.f32 %v664, %v680
    %v683 = vsel %vm135, %v579, 0
    %685 = vmatprep.subr.mxu0 0.0
    %686 = vmatpush1.msra.mxu0 %v265
    %687 = vmatprep.subr.mxu0 0.0
    %688 = vmatpush1.msra.mxu0 %v266
    %689 = vmatprep.subr.mxu0 0.0
    %690 = vmatpush1.msra.mxu0 %v267
    %691 = vmatprep.subr.mxu0 0.0
    %692 = vmatpush1.msra.mxu0 %v268
    %693 = vmatprep.subr.mxu0 0.0
    %694 = vmatpush1.msra.mxu0 0.0
    %695 = vmatprep.subr.mxu0 0.0
    %696 = vmatpush1.msra.mxu0 0.0
    %697 = vmatprep.subr.mxu0 0.0
    %698 = vmatpush1.msra.mxu0 0.0
    %699 = vmatprep.subr.mxu0 0.0
    %700 = vmatpush1.msra.mxu0 0.0
    %701 = vmatprep.subr.mxu0 0.0
    %702 = vmatpush1.msra.mxu0 0.0
    %703 = vmatprep.subr.mxu0 0.0
    %704 = vmatpush1.msra.mxu0 0.0
    %705 = vmatprep.subr.mxu0 0.0
    %706 = vmatpush1.msra.mxu0 0.0
    %707 = vmatprep.subr.mxu0 0.0
    %708 = vmatpush1.msra.mxu0 0.0
    %709 = vmatprep.subr.mxu0 0.0
    %710 = vmatpush1.msra.mxu0 0.0
    %711 = vmatprep.subr.mxu0 0.0
    %712 = vmatpush1.msra.mxu0 0.0
    %713 = vmatprep.subr.mxu0 0.0
    %714 = vmatpush1.msra.mxu0 0.0
    %715 = vmatprep.subr.mxu0 0.0
    %716 = vmatpush1.msra.mxu0 0.0
    %717 = vmatprep.subr.mxu0 0.0
    %718 = vmatpush1.msra.mxu0 0.0
    %719 = vmatprep.subr.mxu0 0.0
    %720 = vmatpush1.msra.mxu0 0.0
    %721 = vmatprep.subr.mxu0 0.0
    %722 = vmatpush1.msra.mxu0 0.0
    %723 = vmatprep.subr.mxu0 0.0
    %724 = vmatpush1.msra.mxu0 0.0
    %725 = vmatprep.subr.mxu0 0.0
    %726 = vmatpush1.msra.mxu0 0.0
    %727 = vmatprep.subr.mxu0 0.0
    %728 = vmatpush1.msra.mxu0 0.0
    %729 = vmatprep.subr.mxu0 0.0
    %730 = vmatpush1.msra.mxu0 0.0
    %731 = vmatprep.subr.mxu0 0.0
    %732 = vmatpush1.msra.mxu0 0.0
    %733 = vmatprep.subr.mxu0 0.0
    %734 = vmatpush1.msra.mxu0 0.0
    %735 = vmatprep.subr.mxu0 0.0
    %736 = vmatpush1.msra.mxu0 0.0
    %737 = vmatprep.subr.mxu0 0.0
    %738 = vmatpush1.msra.mxu0 0.0
    %739 = vmatprep.subr.mxu0 0.0
    %740 = vmatpush1.msra.mxu0 0.0
    %741 = vmatprep.subr.mxu0 0.0
    %742 = vmatpush1.msra.mxu0 0.0
    %743 = vmatprep.subr.mxu0 0.0
    %744 = vmatpush1.msra.mxu0 0.0
    %745 = vmatprep.subr.mxu0 0.0
    %746 = vmatpush1.msra.mxu0 0.0
    %747 = vmatprep.subr.mxu0 0.0
    %748 = vmatpush1.msra.mxu0 0.0
    %749 = vmatprep.mubr.f32.mxu0 0.0
    %750 = vmatmul.mubr.f32.gmra.mrb[0].mxu0 %v683
    %v751 = vpop.f32.mrb[0].mxu0
    %v752 = vadd.f32 0.0, %v751
    %v753 = vpop.f32.mrb[0].mxu0
    %754 = vdwg.mxu0
    %v755 = vadd.f32 %v237, %v752
    %v756 = vxor.u32 %v755, 2147483648
    %v757 = vmul.f32 %v756, 1.442695
    %v758 = vpow.pop %v757
    %v759 = vadd.f32 %v758, 1.0
    %v760 = vrcp.pop %v759
    %v761 = vmul.f32 1.0, %v760
    %v762 = vtanh.pop %v755
    %v763 = vmul.f32 %v761, %v570
    %765 = vrot.lane.b32.xlu0 %v762, 32
    %v766 = vpop.permute.xlu0 %765
    %v768 = vmul.f32 %v761, %v766
    %770 = vrot.lane.b32.xlu0 %v768, 32
    %v771 = vpop.permute.xlu0 %770
    %v773 = vadd.f32 %v763, %v771
    %v774 = vtanh.pop %v773
    %776 = vrot.lane.b32.xlu0 %v774, 32
    %v777 = vpop.permute.xlu0 %776
    %v779 = vmul.f32 %v761, %v777
    %781 = vrot.lane.b32.xlu0 %v779, 64
    %v782 = vpop.permute.xlu0 %781
    %785 = vrot.lane.b32.xlu0 %v682, 96
    %v786 = vpop.permute.xlu0 %785
    %v788 = vsel %vm135, %v782, %v786
    %v790 = vsel %vm382, %v788, 0
    %792 = vmatprep.subr.mxu0 0.0
    %793 = vmatpush1.msra.mxu0 %v269
    %794 = vmatprep.subr.mxu0 0.0
    %795 = vmatpush1.msra.mxu0 %v270
    %796 = vmatprep.subr.mxu0 0.0
    %797 = vmatpush1.msra.mxu0 %v271
    %798 = vmatprep.subr.mxu0 0.0
    %799 = vmatpush1.msra.mxu0 %v272
    %800 = vmatprep.subr.mxu0 0.0
    %801 = vmatpush1.msra.mxu0 %v273
    %802 = vmatprep.subr.mxu0 0.0
    %803 = vmatpush1.msra.mxu0 %v274
    %804 = vmatprep.subr.mxu0 0.0
    %805 = vmatpush1.msra.mxu0 %v275
    %806 = vmatprep.subr.mxu0 0.0
    %807 = vmatpush1.msra.mxu0 %v276
    %808 = vmatprep.subr.mxu0 0.0
    %809 = vmatpush1.msra.mxu0 0.0
    %810 = vmatprep.subr.mxu0 0.0
    %811 = vmatpush1.msra.mxu0 0.0
    %812 = vmatprep.subr.mxu0 0.0
    %813 = vmatpush1.msra.mxu0 0.0
    %814 = vmatprep.subr.mxu0 0.0
    %815 = vmatpush1.msra.mxu0 0.0
    %816 = vmatprep.subr.mxu0 0.0
    %817 = vmatpush1.msra.mxu0 0.0
    %818 = vmatprep.subr.mxu0 0.0
    %819 = vmatpush1.msra.mxu0 0.0
    %820 = vmatprep.subr.mxu0 0.0
    %821 = vmatpush1.msra.mxu0 0.0
    %822 = vmatprep.subr.mxu0 0.0
    %823 = vmatpush1.msra.mxu0 0.0
    %824 = vmatprep.subr.mxu0 0.0
    %825 = vmatpush1.msra.mxu0 0.0
    %826 = vmatprep.subr.mxu0 0.0
    %827 = vmatpush1.msra.mxu0 0.0
    %828 = vmatprep.subr.mxu0 0.0
    %829 = vmatpush1.msra.mxu0 0.0
    %830 = vmatprep.subr.mxu0 0.0
    %831 = vmatpush1.msra.mxu0 0.0
    %832 = vmatprep.subr.mxu0 0.0
    %833 = vmatpush1.msra.mxu0 0.0
    %834 = vmatprep.subr.mxu0 0.0
    %835 = vmatpush1.msra.mxu0 0.0
    %836 = vmatprep.subr.mxu0 0.0
    %837 = vmatpush1.msra.mxu0 0.0
    %838 = vmatprep.subr.mxu0 0.0
    %839 = vmatpush1.msra.mxu0 0.0
    %840 = vmatprep.subr.mxu0 0.0
    %841 = vmatpush1.msra.mxu0 0.0
    %842 = vmatprep.subr.mxu0 0.0
    %843 = vmatpush1.msra.mxu0 0.0
    %844 = vmatprep.subr.mxu0 0.0
    %845 = vmatpush1.msra.mxu0 0.0
    %846 = vmatprep.subr.mxu0 0.0
    %847 = vmatpush1.msra.mxu0 0.0
    %848 = vmatprep.subr.mxu0 0.0
    %849 = vmatpush1.msra.mxu0 0.0
    %850 = vmatprep.subr.mxu0 0.0
    %851 = vmatpush1.msra.mxu0 0.0
    %852 = vmatprep.subr.mxu0 0.0
    %853 = vmatpush1.msra.mxu0 0.0
    %854 = vmatprep.subr.mxu0 0.0
    %855 = vmatpush1.msra.mxu0 0.0
    %856 = vmatprep.mubr.f32.mxu0 0.0
    %857 = vmatmul.mubr.f32.gmra.mrb[0].mxu0 %v790
    %v858 = vpop.f32.mrb[0].mxu0
    %v859 = vadd.f32 0.0, %v858
    %v860 = vpop.f32.mrb[0].mxu0
    %861 = vdwg.mxu0
    %v862 = vxor.u32 %v859, 2147483648
    %v863 = vmul.f32 %v862, 1.442695
    %v864 = vpow.pop %v863
    %v865 = vadd.f32 %v864, 1.0
    %v866 = vrcp.pop %v865
    %v867 = vmul.f32 1.0, %v866
    %v868 = vtanh.pop %v859
    %v869 = vmul.f32 %v867, %v676
    %871 = vrot.lane.b32.xlu0 %v868, 32
    %v872 = vpop.permute.xlu0 %871
    %v874 = vmul.f32 %v867, %v872
    %876 = vrot.lane.b32.xlu0 %v874, 32
    %v877 = vpop.permute.xlu0 %876
    %v879 = vadd.f32 %v869, %v877
    %v880 = vtanh.pop %v879
    %882 = vrot.lane.b32.xlu0 %v880, 32
    %v883 = vpop.permute.xlu0 %882
    %v885 = vmul.f32 %v867, %v883
    %v886 = vsel %vm135, %v782, 0
    %888 = vmatprep.subr.mxu0 0.0
    %889 = vmatpush1.msra.mxu0 %v265
    %890 = vmatprep.subr.mxu0 0.0
    %891 = vmatpush1.msra.mxu0 %v266
    %892 = vmatprep.subr.mxu0 0.0
    %893 = vmatpush1.msra.mxu0 %v267
    %894 = vmatprep.subr.mxu0 0.0
    %895 = vmatpush1.msra.mxu0 %v268
    %896 = vmatprep.subr.mxu0 0.0
    %897 = vmatpush1.msra.mxu0 0.0
    %898 = vmatprep.subr.mxu0 0.0
    %899 = vmatpush1.msra.mxu0 0.0
    %900 = vmatprep.subr.mxu0 0.0
    %901 = vmatpush1.msra.mxu0 0.0
    %902 = vmatprep.subr.mxu0 0.0
    %903 = vmatpush1.msra.mxu0 0.0
    %904 = vmatprep.subr.mxu0 0.0
    %905 = vmatpush1.msra.mxu0 0.0
    %906 = vmatprep.subr.mxu0 0.0
    %907 = vmatpush1.msra.mxu0 0.0
    %908 = vmatprep.subr.mxu0 0.0
    %909 = vmatpush1.msra.mxu0 0.0
    %910 = vmatprep.subr.mxu0 0.0
    %911 = vmatpush1.msra.mxu0 0.0
    %912 = vmatprep.subr.mxu0 0.0
    %913 = vmatpush1.msra.mxu0 0.0
    %914 = vmatprep.subr.mxu0 0.0
    %915 = vmatpush1.msra.mxu0 0.0
    %916 = vmatprep.subr.mxu0 0.0
    %917 = vmatpush1.msra.mxu0 0.0
    %918 = vmatprep.subr.mxu0 0.0
    %919 = vmatpush1.msra.mxu0 0.0
    %920 = vmatprep.subr.mxu0 0.0
    %921 = vmatpush1.msra.mxu0 0.0
    %922 = vmatprep.subr.mxu0 0.0
    %923 = vmatpush1.msra.mxu0 0.0
    %924 = vmatprep.subr.mxu0 0.0
    %925 = vmatpush1.msra.mxu0 0.0
    %926 = vmatprep.subr.mxu0 0.0
    %927 = vmatpush1.msra.mxu0 0.0
    %928 = vmatprep.subr.mxu0 0.0
    %929 = vmatpush1.msra.mxu0 0.0
    %930 = vmatprep.subr.mxu0 0.0
    %931 = vmatpush1.msra.mxu0 0.0
    %932 = vmatprep.subr.mxu0 0.0
    %933 = vmatpush1.msra.mxu0 0.0
    %934 = vmatprep.subr.mxu0 0.0
    %935 = vmatpush1.msra.mxu0 0.0
    %936 = vmatprep.subr.mxu0 0.0
    %937 = vmatpush1.msra.mxu0 0.0
    %938 = vmatprep.subr.mxu0 0.0
    %939 = vmatpush1.msra.mxu0 0.0
    %940 = vmatprep.subr.mxu0 0.0
    %941 = vmatpush1.msra.mxu0 0.0
    %942 = vmatprep.subr.mxu0 0.0
    %943 = vmatpush1.msra.mxu0 0.0
    %944 = vmatprep.subr.mxu0 0.0
    %945 = vmatpush1.msra.mxu0 0.0
    %946 = vmatprep.subr.mxu0 0.0
    %947 = vmatpush1.msra.mxu0 0.0
    %948 = vmatprep.subr.mxu0 0.0
    %949 = vmatpush1.msra.mxu0 0.0
    %950 = vmatprep.subr.mxu0 0.0
    %951 = vmatpush1.msra.mxu0 0.0
    %952 = vmatprep.mubr.f32.mxu0 0.0
    %953 = vmatmul.mubr.f32.gmra.mrb[0].mxu0 %v886
    %v954 = vpop.f32.mrb[0].mxu0
    %v955 = vadd.f32 0.0, %v954
    %v956 = vpop.f32.mrb[0].mxu0
    %957 = vdwg.mxu0
    %v958 = vadd.f32 %v242, %v955
    %v959 = vxor.u32 %v958, 2147483648
    %v960 = vmul.f32 %v959, 1.442695
    %v961 = vpow.pop %v960
    %v962 = vadd.f32 %v961, 1.0
    %v963 = vrcp.pop %v962
    %v964 = vmul.f32 1.0, %v963
    %v965 = vtanh.pop %v958
    %v966 = vmul.f32 %v964, %v773
    %968 = vrot.lane.b32.xlu0 %v965, 32
    %v969 = vpop.permute.xlu0 %968
    %v971 = vmul.f32 %v964, %v969
    %973 = vrot.lane.b32.xlu0 %v971, 32
    %v974 = vpop.permute.xlu0 %973
    %v976 = vadd.f32 %v966, %v974
    %v977 = vtanh.pop %v976
    %979 = vrot.lane.b32.xlu0 %v977, 32
    %v980 = vpop.permute.xlu0 %979
    %v982 = vmul.f32 %v964, %v980
    %984 = vrot.lane.b32.xlu0 %v982, 64
    %v985 = vpop.permute.xlu0 %984
    %988 = vrot.lane.b32.xlu0 %v885, 96
    %v989 = vpop.permute.xlu0 %988
    %v991 = vsel %vm135, %v985, %v989
    %v993 = vsel %vm382, %v991, 0
    %995 = vmatprep.subr.mxu0 0.0
    %996 = vmatpush1.msra.mxu0 %v269
    %997 = vmatprep.subr.mxu0 0.0
    %998 = vmatpush1.msra.mxu0 %v270
    %999 = vmatprep.subr.mxu0 0.0
    %1000 = vmatpush1.msra.mxu0 %v271
    %1001 = vmatprep.subr.mxu0 0.0
    %1002 = vmatpush1.msra.mxu0 %v272
    %1003 = vmatprep.subr.mxu0 0.0
    %1004 = vmatpush1.msra.mxu0 %v273
    %1005 = vmatprep.subr.mxu0 0.0
    %1006 = vmatpush1.msra.mxu0 %v274
    %1007 = vmatprep.subr.mxu0 0.0
    %1008 = vmatpush1.msra.mxu0 %v275
    %1009 = vmatprep.subr.mxu0 0.0
    %1010 = vmatpush1.msra.mxu0 %v276
    %1011 = vmatprep.subr.mxu0 0.0
    %1012 = vmatpush1.msra.mxu0 0.0
    %1013 = vmatprep.subr.mxu0 0.0
    %1014 = vmatpush1.msra.mxu0 0.0
    %1015 = vmatprep.subr.mxu0 0.0
    %1016 = vmatpush1.msra.mxu0 0.0
    %1017 = vmatprep.subr.mxu0 0.0
    %1018 = vmatpush1.msra.mxu0 0.0
    %1019 = vmatprep.subr.mxu0 0.0
    %1020 = vmatpush1.msra.mxu0 0.0
    %1021 = vmatprep.subr.mxu0 0.0
    %1022 = vmatpush1.msra.mxu0 0.0
    %1023 = vmatprep.subr.mxu0 0.0
    %1024 = vmatpush1.msra.mxu0 0.0
    %1025 = vmatprep.subr.mxu0 0.0
    %1026 = vmatpush1.msra.mxu0 0.0
    %1027 = vmatprep.subr.mxu0 0.0
    %1028 = vmatpush1.msra.mxu0 0.0
    %1029 = vmatprep.subr.mxu0 0.0
    %1030 = vmatpush1.msra.mxu0 0.0
    %1031 = vmatprep.subr.mxu0 0.0
    %1032 = vmatpush1.msra.mxu0 0.0
    %1033 = vmatprep.subr.mxu0 0.0
    %1034 = vmatpush1.msra.mxu0 0.0
    %1035 = vmatprep.subr.mxu0 0.0
    %1036 = vmatpush1.msra.mxu0 0.0
    %1037 = vmatprep.subr.mxu0 0.0
    %1038 = vmatpush1.msra.mxu0 0.0
    %1039 = vmatprep.subr.mxu0 0.0
    %1040 = vmatpush1.msra.mxu0 0.0
    %1041 = vmatprep.subr.mxu0 0.0
    %1042 = vmatpush1.msra.mxu0 0.0
    %1043 = vmatprep.subr.mxu0 0.0
    %1044 = vmatpush1.msra.mxu0 0.0
    %1045 = vmatprep.subr.mxu0 0.0
    %1046 = vmatpush1.msra.mxu0 0.0
    %1047 = vmatprep.subr.mxu0 0.0
    %1048 = vmatpush1.msra.mxu0 0.0
    %1049 = vmatprep.subr.mxu0 0.0
    %1050 = vmatpush1.msra.mxu0 0.0
    %1051 = vmatprep.subr.mxu0 0.0
    %1052 = vmatpush1.msra.mxu0 0.0
    %1053 = vmatprep.subr.mxu0 0.0
    %1054 = vmatpush1.msra.mxu0 0.0
    %1055 = vmatprep.subr.mxu0 0.0
    %1056 = vmatpush1.msra.mxu0 0.0
    %1057 = vmatprep.subr.mxu0 0.0
    %1058 = vmatpush1.msra.mxu0 0.0
    %1059 = vmatprep.mubr.f32.mxu0 0.0
    %1060 = vmatmul.mubr.f32.gmra.mrb[0].mxu0 %v993
    %v1061 = vpop.f32.mrb[0].mxu0
    %v1062 = vadd.f32 0.0, %v1061
    %v1063 = vpop.f32.mrb[0].mxu0
    %1064 = vdwg.mxu0
    %v1065 = vxor.u32 %v1062, 2147483648
    %v1066 = vmul.f32 %v1065, 1.442695
    %v1067 = vpow.pop %v1066
    %v1068 = vadd.f32 %v1067, 1.0
    %v1069 = vrcp.pop %v1068
    %v1070 = vmul.f32 1.0, %v1069
    %v1071 = vtanh.pop %v1062
    %v1072 = vmul.f32 %v1070, %v879
    %1074 = vrot.lane.b32.xlu0 %v1071, 32
    %v1075 = vpop.permute.xlu0 %1074
    %v1077 = vmul.f32 %v1070, %v1075
    %1079 = vrot.lane.b32.xlu0 %v1077, 32
    %v1080 = vpop.permute.xlu0 %1079
    %v1082 = vadd.f32 %v1072, %v1080
    %v1083 = vtanh.pop %v1082
    %1085 = vrot.lane.b32.xlu0 %v1083, 32
    %v1086 = vpop.permute.xlu0 %1085
    %v1088 = vmul.f32 %v1070, %v1086
    %v1089 = vsel %vm135, %v985, 0
    %1091 = vmatprep.subr.mxu0 0.0
    %1092 = vmatpush1.msra.mxu0 %v265
    %1093 = vmatprep.subr.mxu0 0.0
    %1094 = vmatpush1.msra.mxu0 %v266
    %1095 = vmatprep.subr.mxu0 0.0
    %1096 = vmatpush1.msra.mxu0 %v267
    %1097 = vmatprep.subr.mxu0 0.0
    %1098 = vmatpush1.msra.mxu0 %v268
    %1099 = vmatprep.subr.mxu0 0.0
    %1100 = vmatpush1.msra.mxu0 0.0
    %1101 = vmatprep.subr.mxu0 0.0
    %1102 = vmatpush1.msra.mxu0 0.0
    %1103 = vmatprep.subr.mxu0 0.0
    %1104 = vmatpush1.msra.mxu0 0.0
    %1105 = vmatprep.subr.mxu0 0.0
    %1106 = vmatpush1.msra.mxu0 0.0
    %1107 = vmatprep.subr.mxu0 0.0
    %1108 = vmatpush1.msra.mxu0 0.0
    %1109 = vmatprep.subr.mxu0 0.0
    %1110 = vmatpush1.msra.mxu0 0.0
    %1111 = vmatprep.subr.mxu0 0.0
    %1112 = vmatpush1.msra.mxu0 0.0
    %1113 = vmatprep.subr.mxu0 0.0
    %1114 = vmatpush1.msra.mxu0 0.0
    %1115 = vmatprep.subr.mxu0 0.0
    %1116 = vmatpush1.msra.mxu0 0.0
    %1117 = vmatprep.subr.mxu0 0.0
    %1118 = vmatpush1.msra.mxu0 0.0
    %1119 = vmatprep.subr.mxu0 0.0
    %1120 = vmatpush1.msra.mxu0 0.0
    %1121 = vmatprep.subr.mxu0 0.0
    %1122 = vmatpush1.msra.mxu0 0.0
    %1123 = vmatprep.subr.mxu0 0.0
    %1124 = vmatpush1.msra.mxu0 0.0
    %1125 = vmatprep.subr.mxu0 0.0
    %1126 = vmatpush1.msra.mxu0 0.0
    %1127 = vmatprep.subr.mxu0 0.0
    %1128 = vmatpush1.msra.mxu0 0.0
    %1129 = vmatprep.subr.mxu0 0.0
    %1130 = vmatpush1.msra.mxu0 0.0
    %1131 = vmatprep.subr.mxu0 0.0
    %1132 = vmatpush1.msra.mxu0 0.0
    %1133 = vmatprep.subr.mxu0 0.0
    %1134 = vmatpush1.msra.mxu0 0.0
    %1135 = vmatprep.subr.mxu0 0.0
    %1136 = vmatpush1.msra.mxu0 0.0
    %1137 = vmatprep.subr.mxu0 0.0
    %1138 = vmatpush1.msra.mxu0 0.0
    %1139 = vmatprep.subr.mxu0 0.0
    %1140 = vmatpush1.msra.mxu0 0.0
    %1141 = vmatprep.subr.mxu0 0.0
    %1142 = vmatpush1.msra.mxu0 0.0
    %1143 = vmatprep.subr.mxu0 0.0
    %1144 = vmatpush1.msra.mxu0 0.0
    %1145 = vmatprep.subr.mxu0 0.0
    %1146 = vmatpush1.msra.mxu0 0.0
    %1147 = vmatprep.subr.mxu0 0.0
    %1148 = vmatpush1.msra.mxu0 0.0
    %1149 = vmatprep.subr.mxu0 0.0
    %1150 = vmatpush1.msra.mxu0 0.0
    %1151 = vmatprep.subr.mxu0 0.0
    %1152 = vmatpush1.msra.mxu0 0.0
    %1153 = vmatprep.subr.mxu0 0.0
    %1154 = vmatpush1.msra.mxu0 0.0
    %1155 = vmatprep.mubr.f32.mxu0 0.0
    %1156 = vmatmul.mubr.f32.gmra.mrb[0].mxu0 %v1089
    %v1157 = vpop.f32.mrb[0].mxu0
    %v1158 = vadd.f32 0.0, %v1157
    %v1159 = vpop.f32.mrb[0].mxu0
    %1160 = vdwg.mxu0
    %v1161 = vadd.f32 %v247, %v1158
    %v1162 = vxor.u32 %v1161, 2147483648
    %v1163 = vmul.f32 %v1162, 1.442695
    %v1164 = vpow.pop %v1163
    %v1165 = vadd.f32 %v1164, 1.0
    %v1166 = vrcp.pop %v1165
    %v1167 = vmul.f32 1.0, %v1166
    %v1168 = vtanh.pop %v1161
    %v1169 = vmul.f32 %v1167, %v976
    %1171 = vrot.lane.b32.xlu0 %v1168, 32
    %v1172 = vpop.permute.xlu0 %1171
    %v1174 = vmul.f32 %v1167, %v1172
    %1176 = vrot.lane.b32.xlu0 %v1174, 32
    %v1177 = vpop.permute.xlu0 %1176
    %v1179 = vadd.f32 %v1169, %v1177
    %v1180 = vtanh.pop %v1179
    %1182 = vrot.lane.b32.xlu0 %v1180, 32
    %v1183 = vpop.permute.xlu0 %1182
    %v1185 = vmul.f32 %v1167, %v1183
    %1187 = vrot.lane.b32.xlu0 %v1185, 64
    %v1188 = vpop.permute.xlu0 %1187
    %1191 = vrot.lane.b32.xlu0 %v1088, 96
    %v1192 = vpop.permute.xlu0 %1191
    %v1194 = vsel %vm135, %v1188, %v1192
    %v1196 = vsel %vm382, %v1194, 0
    %1198 = vmatprep.subr.mxu0 0.0
    %1199 = vmatpush1.msra.mxu0 %v269
    %1200 = vmatprep.subr.mxu0 0.0
    %1201 = vmatpush1.msra.mxu0 %v270
    %1202 = vmatprep.subr.mxu0 0.0
    %1203 = vmatpush1.msra.mxu0 %v271
    %1204 = vmatprep.subr.mxu0 0.0
    %1205 = vmatpush1.msra.mxu0 %v272
    %1206 = vmatprep.subr.mxu0 0.0
    %1207 = vmatpush1.msra.mxu0 %v273
    %1208 = vmatprep.subr.mxu0 0.0
    %1209 = vmatpush1.msra.mxu0 %v274
    %1210 = vmatprep.subr.mxu0 0.0
    %1211 = vmatpush1.msra.mxu0 %v275
    %1212 = vmatprep.subr.mxu0 0.0
    %1213 = vmatpush1.msra.mxu0 %v276
    %1214 = vmatprep.subr.mxu0 0.0
    %1215 = vmatpush1.msra.mxu0 0.0
    %1216 = vmatprep.subr.mxu0 0.0
    %1217 = vmatpush1.msra.mxu0 0.0
    %1218 = vmatprep.subr.mxu0 0.0
    %1219 = vmatpush1.msra.mxu0 0.0
    %1220 = vmatprep.subr.mxu0 0.0
    %1221 = vmatpush1.msra.mxu0 0.0
    %1222 = vmatprep.subr.mxu0 0.0
    %1223 = vmatpush1.msra.mxu0 0.0
    %1224 = vmatprep.subr.mxu0 0.0
    %1225 = vmatpush1.msra.mxu0 0.0
    %1226 = vmatprep.subr.mxu0 0.0
    %1227 = vmatpush1.msra.mxu0 0.0
    %1228 = vmatprep.subr.mxu0 0.0
    %1229 = vmatpush1.msra.mxu0 0.0
    %1230 = vmatprep.subr.mxu0 0.0
    %1231 = vmatpush1.msra.mxu0 0.0
    %1232 = vmatprep.subr.mxu0 0.0
    %1233 = vmatpush1.msra.mxu0 0.0
    %1234 = vmatprep.subr.mxu0 0.0
    %1235 = vmatpush1.msra.mxu0 0.0
    %1236 = vmatprep.subr.mxu0 0.0
    %1237 = vmatpush1.msra.mxu0 0.0
    %1238 = vmatprep.subr.mxu0 0.0
    %1239 = vmatpush1.msra.mxu0 0.0
    %1240 = vmatprep.subr.mxu0 0.0
    %1241 = vmatpush1.msra.mxu0 0.0
    %1242 = vmatprep.subr.mxu0 0.0
    %1243 = vmatpush1.msra.mxu0 0.0
    %1244 = vmatprep.subr.mxu0 0.0
    %1245 = vmatpush1.msra.mxu0 0.0
    %1246 = vmatprep.subr.mxu0 0.0
    %1247 = vmatpush1.msra.mxu0 0.0
    %1248 = vmatprep.subr.mxu0 0.0
    %1249 = vmatpush1.msra.mxu0 0.0
    %1250 = vmatprep.subr.mxu0 0.0
    %1251 = vmatpush1.msra.mxu0 0.0
    %1252 = vmatprep.subr.mxu0 0.0
    %1253 = vmatpush1.msra.mxu0 0.0
    %1254 = vmatprep.subr.mxu0 0.0
    %1255 = vmatpush1.msra.mxu0 0.0
    %1256 = vmatprep.subr.mxu0 0.0
    %1257 = vmatpush1.msra.mxu0 0.0
    %1258 = vmatprep.subr.mxu0 0.0
    %1259 = vmatpush1.msra.mxu0 0.0
    %1260 = vmatprep.subr.mxu0 0.0
    %1261 = vmatpush1.msra.mxu0 0.0
    %1262 = vmatprep.mubr.f32.mxu0 0.0
    %1263 = vmatmul.mubr.f32.gmra.mrb[0].mxu0 %v1196
    %v1264 = vpop.f32.mrb[0].mxu0
    %v1265 = vadd.f32 0.0, %v1264
    %v1266 = vpop.f32.mrb[0].mxu0
    %1267 = vdwg.mxu0
    %v1268 = vxor.u32 %v1265, 2147483648
    %v1269 = vmul.f32 %v1268, 1.442695
    %v1270 = vpow.pop %v1269
    %v1271 = vadd.f32 %v1270, 1.0
    %v1272 = vrcp.pop %v1271
    %v1273 = vmul.f32 1.0, %v1272
    %v1274 = vtanh.pop %v1265
    %v1275 = vmul.f32 %v1273, %v1082
    %1277 = vrot.lane.b32.xlu0 %v1274, 32
    %v1278 = vpop.permute.xlu0 %1277
    %v1280 = vmul.f32 %v1273, %v1278
    %1282 = vrot.lane.b32.xlu0 %v1280, 32
    %v1283 = vpop.permute.xlu0 %1282
    %v1285 = vadd.f32 %v1275, %v1283
    %v1286 = vtanh.pop %v1285
    %1288 = vrot.lane.b32.xlu0 %v1286, 32
    %v1289 = vpop.permute.xlu0 %1288
    %v1291 = vmul.f32 %v1273, %v1289
    %v1292 = vsel %vm135, %v1188, 0
    %1294 = vmatprep.subr.mxu0 0.0
    %1295 = vmatpush1.msra.mxu0 %v265
    %1296 = vmatprep.subr.mxu0 0.0
    %1297 = vmatpush1.msra.mxu0 %v266
    %1298 = vmatprep.subr.mxu0 0.0
    %1299 = vmatpush1.msra.mxu0 %v267
    %1300 = vmatprep.subr.mxu0 0.0
    %1301 = vmatpush1.msra.mxu0 %v268
    %1302 = vmatprep.subr.mxu0 0.0
    %1303 = vmatpush1.msra.mxu0 0.0
    %1304 = vmatprep.subr.mxu0 0.0
    %1305 = vmatpush1.msra.mxu0 0.0
    %1306 = vmatprep.subr.mxu0 0.0
    %1307 = vmatpush1.msra.mxu0 0.0
    %1308 = vmatprep.subr.mxu0 0.0
    %1309 = vmatpush1.msra.mxu0 0.0
    %1310 = vmatprep.subr.mxu0 0.0
    %1311 = vmatpush1.msra.mxu0 0.0
    %1312 = vmatprep.subr.mxu0 0.0
    %1313 = vmatpush1.msra.mxu0 0.0
    %1314 = vmatprep.subr.mxu0 0.0
    %1315 = vmatpush1.msra.mxu0 0.0
    %1316 = vmatprep.subr.mxu0 0.0
    %1317 = vmatpush1.msra.mxu0 0.0
    %1318 = vmatprep.subr.mxu0 0.0
    %1319 = vmatpush1.msra.mxu0 0.0
    %1320 = vmatprep.subr.mxu0 0.0
    %1321 = vmatpush1.msra.mxu0 0.0
    %1322 = vmatprep.subr.mxu0 0.0
    %1323 = vmatpush1.msra.mxu0 0.0
    %1324 = vmatprep.subr.mxu0 0.0
    %1325 = vmatpush1.msra.mxu0 0.0
    %1326 = vmatprep.subr.mxu0 0.0
    %1327 = vmatpush1.msra.mxu0 0.0
    %1328 = vmatprep.subr.mxu0 0.0
    %1329 = vmatpush1.msra.mxu0 0.0
    %1330 = vmatprep.subr.mxu0 0.0
    %1331 = vmatpush1.msra.mxu0 0.0
    %1332 = vmatprep.subr.mxu0 0.0
    %1333 = vmatpush1.msra.mxu0 0.0
    %1334 = vmatprep.subr.mxu0 0.0
    %1335 = vmatpush1.msra.mxu0 0.0
    %1336 = vmatprep.subr.mxu0 0.0
    %1337 = vmatpush1.msra.mxu0 0.0
    %1338 = vmatprep.subr.mxu0 0.0
    %1339 = vmatpush1.msra.mxu0 0.0
    %1340 = vmatprep.subr.mxu0 0.0
    %1341 = vmatpush1.msra.mxu0 0.0
    %1342 = vmatprep.subr.mxu0 0.0
    %1343 = vmatpush1.msra.mxu0 0.0
    %1344 = vmatprep.subr.mxu0 0.0
    %1345 = vmatpush1.msra.mxu0 0.0
    %1346 = vmatprep.subr.mxu0 0.0
    %1347 = vmatpush1.msra.mxu0 0.0
    %1348 = vmatprep.subr.mxu0 0.0
    %1349 = vmatpush1.msra.mxu0 0.0
    %1350 = vmatprep.subr.mxu0 0.0
    %1351 = vmatpush1.msra.mxu0 0.0
    %1352 = vmatprep.subr.mxu0 0.0
    %1353 = vmatpush1.msra.mxu0 0.0
    %1354 = vmatprep.subr.mxu0 0.0
    %1355 = vmatpush1.msra.mxu0 0.0
    %1356 = vmatprep.subr.mxu0 0.0
    %1357 = vmatpush1.msra.mxu0 0.0
    %1358 = vmatprep.mubr.f32.mxu0 0.0
    %1359 = vmatmul.mubr.f32.gmra.mrb[0].mxu0 %v1292
    %v1360 = vpop.f32.mrb[0].mxu0
    %v1361 = vadd.f32 0.0, %v1360
    %v1362 = vpop.f32.mrb[0].mxu0
    %1363 = vdwg.mxu0
    %v1364 = vadd.f32 %v252, %v1361
    %v1365 = vxor.u32 %v1364, 2147483648
    %v1366 = vmul.f32 %v1365, 1.442695
    %v1367 = vpow.pop %v1366
    %v1368 = vadd.f32 %v1367, 1.0
    %v1369 = vrcp.pop %v1368
    %v1370 = vmul.f32 1.0, %v1369
    %v1371 = vtanh.pop %v1364
    %v1372 = vmul.f32 %v1370, %v1179
    %1374 = vrot.lane.b32.xlu0 %v1371, 32
    %v1375 = vpop.permute.xlu0 %1374
    %v1377 = vmul.f32 %v1370, %v1375
    %1379 = vrot.lane.b32.xlu0 %v1377, 32
    %v1380 = vpop.permute.xlu0 %1379
    %v1382 = vadd.f32 %v1372, %v1380
    %v1383 = vtanh.pop %v1382
    %1385 = vrot.lane.b32.xlu0 %v1383, 32
    %v1386 = vpop.permute.xlu0 %1385
    %v1388 = vmul.f32 %v1370, %v1386
    %1390 = vrot.lane.b32.xlu0 %v1388, 64
    %v1391 = vpop.permute.xlu0 %1390
    %1394 = vrot.lane.b32.xlu0 %v1291, 96
    %v1395 = vpop.permute.xlu0 %1394
    %v1397 = vsel %vm135, %v1391, %v1395
    %v1399 = vsel %vm382, %v1397, 0
    %1401 = vmatprep.subr.mxu0 0.0
    %1402 = vmatpush1.msra.mxu0 %v269
    %1403 = vmatprep.subr.mxu0 0.0
    %1404 = vmatpush1.msra.mxu0 %v270
    %1405 = vmatprep.subr.mxu0 0.0
    %1406 = vmatpush1.msra.mxu0 %v271
    %1407 = vmatprep.subr.mxu0 0.0
    %1408 = vmatpush1.msra.mxu0 %v272
    %1409 = vmatprep.subr.mxu0 0.0
    %1410 = vmatpush1.msra.mxu0 %v273
    %1411 = vmatprep.subr.mxu0 0.0
    %1412 = vmatpush1.msra.mxu0 %v274
    %1413 = vmatprep.subr.mxu0 0.0
    %1414 = vmatpush1.msra.mxu0 %v275
    %1415 = vmatprep.subr.mxu0 0.0
    %1416 = vmatpush1.msra.mxu0 %v276
    %1417 = vmatprep.subr.mxu0 0.0
    %1418 = vmatpush1.msra.mxu0 0.0
    %1419 = vmatprep.subr.mxu0 0.0
    %1420 = vmatpush1.msra.mxu0 0.0
    %1421 = vmatprep.subr.mxu0 0.0
    %1422 = vmatpush1.msra.mxu0 0.0
    %1423 = vmatprep.subr.mxu0 0.0
    %1424 = vmatpush1.msra.mxu0 0.0
    %1425 = vmatprep.subr.mxu0 0.0
    %1426 = vmatpush1.msra.mxu0 0.0
    %1427 = vmatprep.subr.mxu0 0.0
    %1428 = vmatpush1.msra.mxu0 0.0
    %1429 = vmatprep.subr.mxu0 0.0
    %1430 = vmatpush1.msra.mxu0 0.0
    %1431 = vmatprep.subr.mxu0 0.0
    %1432 = vmatpush1.msra.mxu0 0.0
    %1433 = vmatprep.subr.mxu0 0.0
    %1434 = vmatpush1.msra.mxu0 0.0
    %1435 = vmatprep.subr.mxu0 0.0
    %1436 = vmatpush1.msra.mxu0 0.0
    %1437 = vmatprep.subr.mxu0 0.0
    %1438 = vmatpush1.msra.mxu0 0.0
    %1439 = vmatprep.subr.mxu0 0.0
    %1440 = vmatpush1.msra.mxu0 0.0
    %1441 = vmatprep.subr.mxu0 0.0
    %1442 = vmatpush1.msra.mxu0 0.0
    %1443 = vmatprep.subr.mxu0 0.0
    %1444 = vmatpush1.msra.mxu0 0.0
    %1445 = vmatprep.subr.mxu0 0.0
    %1446 = vmatpush1.msra.mxu0 0.0
    %1447 = vmatprep.subr.mxu0 0.0
    %1448 = vmatpush1.msra.mxu0 0.0
    %1449 = vmatprep.subr.mxu0 0.0
    %1450 = vmatpush1.msra.mxu0 0.0
    %1451 = vmatprep.subr.mxu0 0.0
    %1452 = vmatpush1.msra.mxu0 0.0
    %1453 = vmatprep.subr.mxu0 0.0
    %1454 = vmatpush1.msra.mxu0 0.0
    %1455 = vmatprep.subr.mxu0 0.0
    %1456 = vmatpush1.msra.mxu0 0.0
    %1457 = vmatprep.subr.mxu0 0.0
    %1458 = vmatpush1.msra.mxu0 0.0
    %1459 = vmatprep.subr.mxu0 0.0
    %1460 = vmatpush1.msra.mxu0 0.0
    %1461 = vmatprep.subr.mxu0 0.0
    %1462 = vmatpush1.msra.mxu0 0.0
    %1463 = vmatprep.subr.mxu0 0.0
    %1464 = vmatpush1.msra.mxu0 0.0
    %1465 = vmatprep.mubr.f32.mxu0 0.0
    %1466 = vmatmul.mubr.f32.gmra.mrb[0].mxu0 %v1399
    %v1467 = vpop.f32.mrb[0].mxu0
    %v1468 = vadd.f32 0.0, %v1467
    %v1469 = vpop.f32.mrb[0].mxu0
    %1470 = vdwg.mxu0
    %v1471 = vxor.u32 %v1468, 2147483648
    %v1472 = vmul.f32 %v1471, 1.442695
    %v1473 = vpow.pop %v1472
    %v1474 = vadd.f32 %v1473, 1.0
    %v1475 = vrcp.pop %v1474
    %v1476 = vmul.f32 1.0, %v1475
    %v1477 = vtanh.pop %v1468
    %v1478 = vmul.f32 %v1476, %v1285
    %1480 = vrot.lane.b32.xlu0 %v1477, 32
    %v1481 = vpop.permute.xlu0 %1480
    %v1483 = vmul.f32 %v1476, %v1481
    %1485 = vrot.lane.b32.xlu0 %v1483, 32
    %v1486 = vpop.permute.xlu0 %1485
    %v1488 = vadd.f32 %v1478, %v1486
    %v1489 = vtanh.pop %v1488
    %1491 = vrot.lane.b32.xlu0 %v1489, 32
    %v1492 = vpop.permute.xlu0 %1491
    %v1494 = vmul.f32 %v1476, %v1492
    %v1495 = vsel %vm135, %v1391, 0
    %1497 = vmatprep.subr.mxu0 0.0
    %1498 = vmatpush1.msra.mxu0 %v265
    %1499 = vmatprep.subr.mxu0 0.0
    %1500 = vmatpush1.msra.mxu0 %v266
    %1501 = vmatprep.subr.mxu0 0.0
    %1502 = vmatpush1.msra.mxu0 %v267
    %1503 = vmatprep.subr.mxu0 0.0
    %1504 = vmatpush1.msra.mxu0 %v268
    %1505 = vmatprep.subr.mxu0 0.0
    %1506 = vmatpush1.msra.mxu0 0.0
    %1507 = vmatprep.subr.mxu0 0.0
    %1508 = vmatpush1.msra.mxu0 0.0
    %1509 = vmatprep.subr.mxu0 0.0
    %1510 = vmatpush1.msra.mxu0 0.0
    %1511 = vmatprep.subr.mxu0 0.0
    %1512 = vmatpush1.msra.mxu0 0.0
    %1513 = vmatprep.subr.mxu0 0.0
    %1514 = vmatpush1.msra.mxu0 0.0
    %1515 = vmatprep.subr.mxu0 0.0
    %1516 = vmatpush1.msra.mxu0 0.0
    %1517 = vmatprep.subr.mxu0 0.0
    %1518 = vmatpush1.msra.mxu0 0.0
    %1519 = vmatprep.subr.mxu0 0.0
    %1520 = vmatpush1.msra.mxu0 0.0
    %1521 = vmatprep.subr.mxu0 0.0
    %1522 = vmatpush1.msra.mxu0 0.0
    %1523 = vmatprep.subr.mxu0 0.0
    %1524 = vmatpush1.msra.mxu0 0.0
    %1525 = vmatprep.subr.mxu0 0.0
    %1526 = vmatpush1.msra.mxu0 0.0
    %1527 = vmatprep.subr.mxu0 0.0
    %1528 = vmatpush1.msra.mxu0 0.0
    %1529 = vmatprep.subr.mxu0 0.0
    %1530 = vmatpush1.msra.mxu0 0.0
    %1531 = vmatprep.subr.mxu0 0.0
    %1532 = vmatpush1.msra.mxu0 0.0
    %1533 = vmatprep.subr.mxu0 0.0
    %1534 = vmatpush1.msra.mxu0 0.0
    %1535 = vmatprep.subr.mxu0 0.0
    %1536 = vmatpush1.msra.mxu0 0.0
    %1537 = vmatprep.subr.mxu0 0.0
    %1538 = vmatpush1.msra.mxu0 0.0
    %1539 = vmatprep.subr.mxu0 0.0
    %1540 = vmatpush1.msra.mxu0 0.0
    %1541 = vmatprep.subr.mxu0 0.0
    %1542 = vmatpush1.msra.mxu0 0.0
    %1543 = vmatprep.subr.mxu0 0.0
    %1544 = vmatpush1.msra.mxu0 0.0
    %1545 = vmatprep.subr.mxu0 0.0
    %1546 = vmatpush1.msra.mxu0 0.0
    %1547 = vmatprep.subr.mxu0 0.0
    %1548 = vmatpush1.msra.mxu0 0.0
    %1549 = vmatprep.subr.mxu0 0.0
    %1550 = vmatpush1.msra.mxu0 0.0
    %1551 = vmatprep.subr.mxu0 0.0
    %1552 = vmatpush1.msra.mxu0 0.0
    %1553 = vmatprep.subr.mxu0 0.0
    %1554 = vmatpush1.msra.mxu0 0.0
    %1555 = vmatprep.subr.mxu0 0.0
    %1556 = vmatpush1.msra.mxu0 0.0
    %1557 = vmatprep.subr.mxu0 0.0
    %1558 = vmatpush1.msra.mxu0 0.0
    %1559 = vmatprep.subr.mxu0 0.0
    %1560 = vmatpush1.msra.mxu0 0.0
    %1561 = vmatprep.mubr.f32.mxu0 0.0
    %1562 = vmatmul.mubr.f32.gmra.mrb[0].mxu0 %v1495
    %v1563 = vpop.f32.mrb[0].mxu0
    %v1564 = vadd.f32 0.0, %v1563
    %v1565 = vpop.f32.mrb[0].mxu0
    %1566 = vdwg.mxu0
    %v1567 = vadd.f32 %v257, %v1564
    %v1568 = vxor.u32 %v1567, 2147483648
    %v1569 = vmul.f32 %v1568, 1.442695
    %v1570 = vpow.pop %v1569
    %v1571 = vadd.f32 %v1570, 1.0
    %v1572 = vrcp.pop %v1571
    %v1573 = vmul.f32 1.0, %v1572
    %v1574 = vtanh.pop %v1567
    %v1575 = vmul.f32 %v1573, %v1382
    %1577 = vrot.lane.b32.xlu0 %v1574, 32
    %v1578 = vpop.permute.xlu0 %1577
    %v1580 = vmul.f32 %v1573, %v1578
    %1582 = vrot.lane.b32.xlu0 %v1580, 32
    %v1583 = vpop.permute.xlu0 %1582
    %v1585 = vadd.f32 %v1575, %v1583
    %v1586 = vtanh.pop %v1585
    %1588 = vrot.lane.b32.xlu0 %v1586, 32
    %v1589 = vpop.permute.xlu0 %1588
    %v1591 = vmul.f32 %v1573, %v1589
    %1593 = vrot.lane.b32.xlu0 %v1591, 64
    %v1594 = vpop.permute.xlu0 %1593
    %1597 = vrot.lane.b32.xlu0 %v1494, 96
    %v1598 = vpop.permute.xlu0 %1597
    %v1600 = vsel %vm135, %v1594, %v1598
    %v1602 = vsel %vm382, %v1600, 0
    %1604 = vmatprep.subr.mxu0 0.0
    %1605 = vmatpush1.msra.mxu0 %v269
    %1606 = vmatprep.subr.mxu0 0.0
    %1607 = vmatpush1.msra.mxu0 %v270
    %1608 = vmatprep.subr.mxu0 0.0
    %1609 = vmatpush1.msra.mxu0 %v271
    %1610 = vmatprep.subr.mxu0 0.0
    %1611 = vmatpush1.msra.mxu0 %v272
    %1612 = vmatprep.subr.mxu0 0.0
    %1613 = vmatpush1.msra.mxu0 %v273
    %1614 = vmatprep.subr.mxu0 0.0
    %1615 = vmatpush1.msra.mxu0 %v274
    %1616 = vmatprep.subr.mxu0 0.0
    %1617 = vmatpush1.msra.mxu0 %v275
    %1618 = vmatprep.subr.mxu0 0.0
    %1619 = vmatpush1.msra.mxu0 %v276
    %1620 = vmatprep.subr.mxu0 0.0
    %1621 = vmatpush1.msra.mxu0 0.0
    %1622 = vmatprep.subr.mxu0 0.0
    %1623 = vmatpush1.msra.mxu0 0.0
    %1624 = vmatprep.subr.mxu0 0.0
    %1625 = vmatpush1.msra.mxu0 0.0
    %1626 = vmatprep.subr.mxu0 0.0
    %1627 = vmatpush1.msra.mxu0 0.0
    %1628 = vmatprep.subr.mxu0 0.0
    %1629 = vmatpush1.msra.mxu0 0.0
    %1630 = vmatprep.subr.mxu0 0.0
    %1631 = vmatpush1.msra.mxu0 0.0
    %1632 = vmatprep.subr.mxu0 0.0
    %1633 = vmatpush1.msra.mxu0 0.0
    %1634 = vmatprep.subr.mxu0 0.0
    %1635 = vmatpush1.msra.mxu0 0.0
    %1636 = vmatprep.subr.mxu0 0.0
    %1637 = vmatpush1.msra.mxu0 0.0
    %1638 = vmatprep.subr.mxu0 0.0
    %1639 = vmatpush1.msra.mxu0 0.0
    %1640 = vmatprep.subr.mxu0 0.0
    %1641 = vmatpush1.msra.mxu0 0.0
    %1642 = vmatprep.subr.mxu0 0.0
    %1643 = vmatpush1.msra.mxu0 0.0
    %1644 = vmatprep.subr.mxu0 0.0
    %1645 = vmatpush1.msra.mxu0 0.0
    %1646 = vmatprep.subr.mxu0 0.0
    %1647 = vmatpush1.msra.mxu0 0.0
    %1648 = vmatprep.subr.mxu0 0.0
    %1649 = vmatpush1.msra.mxu0 0.0
    %1650 = vmatprep.subr.mxu0 0.0
    %1651 = vmatpush1.msra.mxu0 0.0
    %1652 = vmatprep.subr.mxu0 0.0
    %1653 = vmatpush1.msra.mxu0 0.0
    %1654 = vmatprep.subr.mxu0 0.0
    %1655 = vmatpush1.msra.mxu0 0.0
    %1656 = vmatprep.subr.mxu0 0.0
    %1657 = vmatpush1.msra.mxu0 0.0
    %1658 = vmatprep.subr.mxu0 0.0
    %1659 = vmatpush1.msra.mxu0 0.0
    %1660 = vmatprep.subr.mxu0 0.0
    %1661 = vmatpush1.msra.mxu0 0.0
    %1662 = vmatprep.subr.mxu0 0.0
    %1663 = vmatpush1.msra.mxu0 0.0
    %1664 = vmatprep.subr.mxu0 0.0
    %1665 = vmatpush1.msra.mxu0 0.0
    %1666 = vmatprep.subr.mxu0 0.0
    %1667 = vmatpush1.msra.mxu0 0.0
    %1668 = vmatprep.mubr.f32.mxu0 0.0
    %1669 = vmatmul.mubr.f32.gmra.mrb[0].mxu0 %v1602
    %v1670 = vpop.f32.mrb[0].mxu0
    %v1671 = vadd.f32 0.0, %v1670
    %v1672 = vpop.f32.mrb[0].mxu0
    %1673 = vdwg.mxu0
    %v1674 = vxor.u32 %v1671, 2147483648
    %v1675 = vmul.f32 %v1674, 1.442695
    %v1676 = vpow.pop %v1675
    %v1677 = vadd.f32 %v1676, 1.0
    %v1678 = vrcp.pop %v1677
    %v1679 = vmul.f32 1.0, %v1678
    %v1680 = vtanh.pop %v1671
    %v1681 = vmul.f32 %v1679, %v1488
    %1683 = vrot.lane.b32.xlu0 %v1680, 32
    %v1684 = vpop.permute.xlu0 %1683
    %v1686 = vmul.f32 %v1679, %v1684
    %1688 = vrot.lane.b32.xlu0 %v1686, 32
    %v1689 = vpop.permute.xlu0 %1688
    %v1691 = vadd.f32 %v1681, %v1689
    %v1692 = vtanh.pop %v1691
    %1694 = vrot.lane.b32.xlu0 %v1692, 32
    %v1695 = vpop.permute.xlu0 %1694
    %v1697 = vmul.f32 %v1679, %v1695
    %v1698 = vsel %vm135, %v1594, 0
    %1700 = vmatprep.subr.mxu0 0.0
    %1701 = vmatpush1.msra.mxu0 %v265
    %1702 = vmatprep.subr.mxu0 0.0
    %1703 = vmatpush1.msra.mxu0 %v266
    %1704 = vmatprep.subr.mxu0 0.0
    %1705 = vmatpush1.msra.mxu0 %v267
    %1706 = vmatprep.subr.mxu0 0.0
    %1707 = vmatpush1.msra.mxu0 %v268
    %1708 = vmatprep.subr.mxu0 0.0
    %1709 = vmatpush1.msra.mxu0 0.0
    %1710 = vmatprep.subr.mxu0 0.0
    %1711 = vmatpush1.msra.mxu0 0.0
    %1712 = vmatprep.subr.mxu0 0.0
    %1713 = vmatpush1.msra.mxu0 0.0
    %1714 = vmatprep.subr.mxu0 0.0
    %1715 = vmatpush1.msra.mxu0 0.0
    %1716 = vmatprep.subr.mxu0 0.0
    %1717 = vmatpush1.msra.mxu0 0.0
    %1718 = vmatprep.subr.mxu0 0.0
    %1719 = vmatpush1.msra.mxu0 0.0
    %1720 = vmatprep.subr.mxu0 0.0
    %1721 = vmatpush1.msra.mxu0 0.0
    %1722 = vmatprep.subr.mxu0 0.0
    %1723 = vmatpush1.msra.mxu0 0.0
    %1724 = vmatprep.subr.mxu0 0.0
    %1725 = vmatpush1.msra.mxu0 0.0
    %1726 = vmatprep.subr.mxu0 0.0
    %1727 = vmatpush1.msra.mxu0 0.0
    %1728 = vmatprep.subr.mxu0 0.0
    %1729 = vmatpush1.msra.mxu0 0.0
    %1730 = vmatprep.subr.mxu0 0.0
    %1731 = vmatpush1.msra.mxu0 0.0
    %1732 = vmatprep.subr.mxu0 0.0
    %1733 = vmatpush1.msra.mxu0 0.0
    %1734 = vmatprep.subr.mxu0 0.0
    %1735 = vmatpush1.msra.mxu0 0.0
    %1736 = vmatprep.subr.mxu0 0.0
    %1737 = vmatpush1.msra.mxu0 0.0
    %1738 = vmatprep.subr.mxu0 0.0
    %1739 = vmatpush1.msra.mxu0 0.0
    %1740 = vmatprep.subr.mxu0 0.0
    %1741 = vmatpush1.msra.mxu0 0.0
    %1742 = vmatprep.subr.mxu0 0.0
    %1743 = vmatpush1.msra.mxu0 0.0
    %1744 = vmatprep.subr.mxu0 0.0
    %1745 = vmatpush1.msra.mxu0 0.0
    %1746 = vmatprep.subr.mxu0 0.0
    %1747 = vmatpush1.msra.mxu0 0.0
    %1748 = vmatprep.subr.mxu0 0.0
    %1749 = vmatpush1.msra.mxu0 0.0
    %1750 = vmatprep.subr.mxu0 0.0
    %1751 = vmatpush1.msra.mxu0 0.0
    %1752 = vmatprep.subr.mxu0 0.0
    %1753 = vmatpush1.msra.mxu0 0.0
    %1754 = vmatprep.subr.mxu0 0.0
    %1755 = vmatpush1.msra.mxu0 0.0
    %1756 = vmatprep.subr.mxu0 0.0
    %1757 = vmatpush1.msra.mxu0 0.0
    %1758 = vmatprep.subr.mxu0 0.0
    %1759 = vmatpush1.msra.mxu0 0.0
    %1760 = vmatprep.subr.mxu0 0.0
    %1761 = vmatpush1.msra.mxu0 0.0
    %1762 = vmatprep.subr.mxu0 0.0
    %1763 = vmatpush1.msra.mxu0 0.0
    %1764 = vmatprep.mubr.f32.mxu0 0.0
    %1765 = vmatmul.mubr.f32.gmra.mrb[0].mxu0 %v1698
    %v1766 = vpop.f32.mrb[0].mxu0
    %v1767 = vadd.f32 0.0, %v1766
    %v1768 = vpop.f32.mrb[0].mxu0
    %1769 = vdwg.mxu0
    %v1770 = vadd.f32 %v262, %v1767
    %v1771 = vxor.u32 %v1770, 2147483648
    %v1772 = vmul.f32 %v1771, 1.442695
    %v1773 = vpow.pop %v1772
    %v1774 = vadd.f32 %v1773, 1.0
    %v1775 = vrcp.pop %v1774
    %v1776 = vmul.f32 1.0, %v1775
    %v1777 = vtanh.pop %v1770
    %v1778 = vmul.f32 %v1776, %v1585
    %1780 = vrot.lane.b32.xlu0 %v1777, 32
    %v1781 = vpop.permute.xlu0 %1780
    %v1783 = vmul.f32 %v1776, %v1781
    %1785 = vrot.lane.b32.xlu0 %v1783, 32
    %v1786 = vpop.permute.xlu0 %1785
    %v1788 = vadd.f32 %v1778, %v1786
    %v1789 = vtanh.pop %v1788
    %1791 = vrot.lane.b32.xlu0 %v1789, 32
    %v1792 = vpop.permute.xlu0 %1791
    %v1794 = vmul.f32 %v1776, %v1792
    %1796 = vrot.lane.b32.xlu0 %v1794, 64
    %v1797 = vpop.permute.xlu0 %1796
    %1800 = vrot.lane.b32.xlu0 %v1697, 96
    %v1801 = vpop.permute.xlu0 %1800
    %v1803 = vsel %vm135, %v1797, %v1801
    %v1805 = vsel %vm382, %v1803, 0
    %1807 = vmatprep.subr.mxu0 0.0
    %1808 = vmatpush1.msra.mxu0 %v269
    %1809 = vmatprep.subr.mxu0 0.0
    %1810 = vmatpush1.msra.mxu0 %v270
    %1811 = vmatprep.subr.mxu0 0.0
    %1812 = vmatpush1.msra.mxu0 %v271
    %1813 = vmatprep.subr.mxu0 0.0
    %1814 = vmatpush1.msra.mxu0 %v272
    %1815 = vmatprep.subr.mxu0 0.0
    %1816 = vmatpush1.msra.mxu0 %v273
    %1817 = vmatprep.subr.mxu0 0.0
    %1818 = vmatpush1.msra.mxu0 %v274
    %1819 = vmatprep.subr.mxu0 0.0
    %1820 = vmatpush1.msra.mxu0 %v275
    %1821 = vmatprep.subr.mxu0 0.0
    %1822 = vmatpush1.msra.mxu0 %v276
    %1823 = vmatprep.subr.mxu0 0.0
    %1824 = vmatpush1.msra.mxu0 0.0
    %1825 = vmatprep.subr.mxu0 0.0
    %1826 = vmatpush1.msra.mxu0 0.0
    %1827 = vmatprep.subr.mxu0 0.0
    %1828 = vmatpush1.msra.mxu0 0.0
    %1829 = vmatprep.subr.mxu0 0.0
    %1830 = vmatpush1.msra.mxu0 0.0
    %1831 = vmatprep.subr.mxu0 0.0
    %1832 = vmatpush1.msra.mxu0 0.0
    %1833 = vmatprep.subr.mxu0 0.0
    %1834 = vmatpush1.msra.mxu0 0.0
    %1835 = vmatprep.subr.mxu0 0.0
    %1836 = vmatpush1.msra.mxu0 0.0
    %1837 = vmatprep.subr.mxu0 0.0
    %1838 = vmatpush1.msra.mxu0 0.0
    %1839 = vmatprep.subr.mxu0 0.0
    %1840 = vmatpush1.msra.mxu0 0.0
    %1841 = vmatprep.subr.mxu0 0.0
    %1842 = vmatpush1.msra.mxu0 0.0
    %1843 = vmatprep.subr.mxu0 0.0
    %1844 = vmatpush1.msra.mxu0 0.0
    %1845 = vmatprep.subr.mxu0 0.0
    %1846 = vmatpush1.msra.mxu0 0.0
    %1847 = vmatprep.subr.mxu0 0.0
    %1848 = vmatpush1.msra.mxu0 0.0
    %1849 = vmatprep.subr.mxu0 0.0
    %1850 = vmatpush1.msra.mxu0 0.0
    %1851 = vmatprep.subr.mxu0 0.0
    %1852 = vmatpush1.msra.mxu0 0.0
    %1853 = vmatprep.subr.mxu0 0.0
    %1854 = vmatpush1.msra.mxu0 0.0
    %1855 = vmatprep.subr.mxu0 0.0
    %1856 = vmatpush1.msra.mxu0 0.0
    %1857 = vmatprep.subr.mxu0 0.0
    %1858 = vmatpush1.msra.mxu0 0.0
    %1859 = vmatprep.subr.mxu0 0.0
    %1860 = vmatpush1.msra.mxu0 0.0
    %1861 = vmatprep.subr.mxu0 0.0
    %1862 = vmatpush1.msra.mxu0 0.0
    %1863 = vmatprep.subr.mxu0 0.0
    %1864 = vmatpush1.msra.mxu0 0.0
    %1865 = vmatprep.subr.mxu0 0.0
    %1866 = vmatpush1.msra.mxu0 0.0
    %1867 = vmatprep.subr.mxu0 0.0
    %1868 = vmatpush1.msra.mxu0 0.0
    %1869 = vmatprep.subr.mxu0 0.0
    %1870 = vmatpush1.msra.mxu0 0.0
    %1871 = vmatprep.mubr.f32.mxu0 0.0
    %1872 = vmatmul.mubr.f32.gmra.mrb[0].mxu0 %v1805
    %v1873 = vpop.f32.mrb[0].mxu0
    %v1874 = vadd.f32 0.0, %v1873
    %v1875 = vpop.f32.mrb[0].mxu0
    %1876 = vdwg.mxu0
    %v1877 = vxor.u32 %v1874, 2147483648
    %v1878 = vmul.f32 %v1877, 1.442695
    %v1879 = vpow.pop %v1878
    %v1880 = vadd.f32 %v1879, 1.0
    %v1881 = vrcp.pop %v1880
    %v1882 = vmul.f32 1.0, %v1881
    %v1883 = vtanh.pop %v1874
    %v1884 = vmul.f32 %v1882, %v1691
    %1886 = vrot.lane.b32.xlu0 %v1883, 32
    %v1887 = vpop.permute.xlu0 %1886
    %v1889 = vmul.f32 %v1882, %v1887
    %1891 = vrot.lane.b32.xlu0 %v1889, 32
    %v1892 = vpop.permute.xlu0 %1891
    %v1894 = vadd.f32 %v1884, %v1892
    %v1895 = vtanh.pop %v1894
    %1897 = vrot.lane.b32.xlu0 %v1895, 32
    %v1898 = vpop.permute.xlu0 %1897
    %v1900 = vmul.f32 %v1882, %v1898
    %v1902 = vlaneseq
    %v1903 = vshrl.u32 %v1902, 7
    %v1904 = vsub.s32 0, %v1903
    %v1905 = vrot.slane %v277, %v1904
    %1906 = vrot.lane.b32.xlu0 %v1905, 64
    %v1907 = vpop.permute.xlu0 %1906
    %v1909 = vmul.f32 %v1794, %v1907
    %1911 = vrot.lane.b32.xlu0 %v1909, 64
    %v1912 = vpop.permute.xlu0 %1911
    %v1914 = vsel %vm135, %v1912, 0.0
    %1915 = vadd.xlane.f32.xlu0 %v1914
    %v1916 = vpop.xlane.xlu0 %1915
    %1917 = vrot.lane.b32.xlu0 %v1905, 32
    %v1918 = vpop.permute.xlu0 %1917
    %v1920 = vmul.f32 %v1900, %v1918
    %1922 = vrot.lane.b32.xlu0 %v1920, 64
    %v1923 = vpop.permute.xlu0 %1922
    %v1925 = vsel %vm135, %v1923, 0.0
    %1926 = vadd.xlane.f32.xlu0 %v1925
    %v1927 = vpop.xlane.xlu0 %1926
    %v1928 = vadd.f32 %v1916, %v1927
    %v1930 = vlaneseq
    %v1931 = vshrl.u32 %v1930, 7
    %v1932 = vsub.s32 0, %v1931
    %v1933 = vrot.slane %v278, %v1932
    %v1935 = vadd.f32 %v1928, %v1933
    %vm1936 = vcmask 7168
    %1937 = vst.msk [vmem:[%s8] sm:$0xff] %vm1936, %v1935
    // Predicated region
    $region38: #{lstm_model_forward.1} parent=1 // pred_check
      _
    $region39: #{lstm_model_forward.1} parent=1 // pred_check_branch
      %1939 = sbr.rel (0) target = $region41
    $region40: #{lstm_model_forward.1} parent=1 // pred_region
      _
    $region41: #{lstm_model_forward.1} parent=1 // pred_fallthru
      _
    // Predicated region
    $region42: #{lstm_model_forward.1} parent=1 // pred_check
      _
    $region43: #{lstm_model_forward.1} parent=1 // pred_check_branch
      %1941 = sbr.rel (0) target = $region45
    $region44: #{lstm_model_forward.1} parent=1 // pred_region
      _
    $region45: #{lstm_model_forward.1} parent=1 // pred_fallthru
      _
    %1942 = vsyncpa [#allocation4], 1

</llo_original>
